<compile_context>
chip_gen: v7x
topology: tpu7x:2x2x1
jax: 0.10.0
libtpu: 0.0.40
codegen_flags: <defaults>
</compile_context>

<pallas_src>
import functools
import math

import jax
import jax.numpy as jnp
from jax import lax
from jax.experimental import pallas as pl
from jax.experimental.pallas import tpu as pltpu


def _mha_kernel(D, Dh, mask_mode, return_qk, kv_every_tile, mask_value, *refs):
    """One (batch, query-tile, head) grid step.

    refs (in order):
      x_ref    (1, T, D)   compute dtype      full context for this batch
      wq_ref   (D, D)      compute dtype      Wq^T, Dh^-0.5 pre-folded
      bq_ref   (1, D)      f32                bq, Dh^-0.5 pre-folded
      wkv_ref  (D, 2D)     compute dtype      [Wk^T | Wv^T]
      bkv_ref  (1, 2D)     f32                [0 | bv]
      wo_ref   (D, D)      compute dtype      Wo^T
      bo_ref   (1, D)      f32
      mask_ref (Tq, T)     f32                only when mask_mode == "input"
      out_ref  (1, Tq, D)
      qk_ref   (1, 1, Tq, T) f32              only when return_qk
      q_scr    (H, Tq, Dh)  compute dtype     scratch: Q, all heads, this tile
      kv_scr   (2H, T, Dh)  compute dtype     scratch: K (0..H-1), V (H..2H-1)
      acc_scr  (H, Tq, Dh)  f32               scratch: per-head wv
    """
    (x_ref, wq_ref, bq_ref, wkv_ref, bkv_ref, wo_ref, bo_ref) = refs[:7]
    i = 7
    mask_ref = None
    if mask_mode == "input":
        mask_ref = refs[i]
        i += 1
    out_ref = refs[i]
    i += 1
    qk_ref = None
    if return_qk:
        qk_ref = refs[i]
        i += 1
    q_scr, kv_scr, acc_scr = refs[i], refs[i + 1], refs[i + 2]

    nt = pl.program_id(1)
    h = pl.program_id(2)
    n_h = pl.num_programs(2)
    H = acc_scr.shape[0]
    Tq = acc_scr.shape[1]
    T = kv_scr.shape[1]
    cdt = x_ref.dtype            # MXU compute dtype; accumulation stays f32.

    kv_cond = (h == 0) if kv_every_tile else jnp.logical_and(nt == 0, h == 0)

    @pl.when(kv_cond)
    def _project_kv():
        # Full-width (T, D) @ (D, 2D) K/V projection for ALL heads at once.
        kv = jnp.dot(x_ref[0], wkv_ref[...],
                     preferred_element_type=jnp.float32) + bkv_ref[...]
        kv = kv.astype(kv_scr.dtype)
        for hh in range(H):                       # static unroll: head-major split
            kv_scr[hh] = kv[:, hh * Dh:(hh + 1) * Dh]                     # K_h
            kv_scr[H + hh] = kv[:, D + hh * Dh:D + (hh + 1) * Dh]         # V_h

    @pl.when(h == 0)
    def _project_q():
        # Full-width (Tq, D) @ (D, D) Q projection for this tile, all heads.
        row0 = pl.multiple_of(nt * Tq, Tq)
        xq = x_ref[0, pl.ds(row0, Tq), :]
        q = jnp.dot(xq, wq_ref[...],
                    preferred_element_type=jnp.float32) + bq_ref[...]
        q = q.astype(q_scr.dtype)
        for hh in range(H):
            q_scr[hh] = q[:, hh * Dh:(hh + 1) * Dh]

    q = q_scr[h]               # (Tq, Dh)
    k = kv_scr[h]              # (T,  Dh)
    v = kv_scr[H + h]          # (T,  Dh)

    # Logits: contract over Dh without an explicit transpose relayout.
    qk = lax.dot_general(q, k, (((1,), (1,)), ((), ())),
                         preferred_element_type=jnp.float32)     # (Tq, T)

    if mask_mode == "input":
        qk = qk + mask_ref[...]
    elif mask_mode == "causal":
        row = nt * Tq + lax.broadcasted_iota(jnp.int32, (Tq, T), 0)
        col = lax.broadcasted_iota(jnp.int32, (Tq, T), 1)
        qk = jnp.where(col > row, qk + jnp.float32(mask_value), qk)

    if return_qk:
        qk_ref[0, 0] = qk      # module returns float() post-mask, pre-softmax

    # Softmax over keys (f32); approximate reciprocal runs on the EUP slot.
    m = jnp.max(qk, axis=-1, keepdims=True)
    e = jnp.exp(qk - m)
    p = e * pl.reciprocal(jnp.sum(e, axis=-1, keepdims=True), approx=True)

    # Per-head attention-weighted values, stashed head-major.
    acc_scr[h] = jnp.dot(p.astype(cdt), v, preferred_element_type=jnp.float32)

    @pl.when(h == n_h - 1)
    def _project_out():
        # ONE full-width output projection (Tq, D) @ (D, D) + bo.
        wv = jnp.concatenate([acc_scr[hh] for hh in range(H)], axis=-1)
        out = jnp.dot(wv.astype(cdt), wo_ref[...],
                      preferred_element_type=jnp.float32) + bo_ref[...]
        out_ref[0] = out.astype(out_ref.dtype)


def _ceil_to(x, m):
    return ((x + m - 1) // m) * m


def _padded_bytes(shape, dtype):
    """VMEM footprint of one buffer of `shape`, padded to (8, 128) tiles."""
    s = list(shape)
    if len(s) >= 1:
        s[-1] = _ceil_to(s[-1], 128)
    if len(s) >= 2:
        s[-2] = _ceil_to(s[-2], 8)
    return int(math.prod(s)) * jnp.dtype(dtype).itemsize


def multi_head_attention(x, params, mask=None, *, n_head,
                         causal=False, return_qk=True,
                         compute_dtype=jnp.float32, q_block=None,
                         nt_parallel=False, mask_value=-1e9,
                         vmem_limit_bytes=None):
    """x: [B, T, D].  Returns (out [B, T, D], qk [B, H, T, T] f32 or None)."""
    B, T, D = x.shape
    H = int(n_head)
    assert D % H == 0
    Dh = D // H
    out_dtype = x.dtype
    f32 = jnp.float32

    if q_block is None or q_block >= T:
        Tq = T
    else:
        assert T % q_block == 0, "T must be divisible by q_block"
        assert q_block % 8 == 0, "q_block must be a multiple of 8"
        Tq = int(q_block)
    NT = T // Tq

    # ----- host-side weight preparation (once, outside the kernel) ----------
    scale2 = float(Dh) ** (-0.5)                 # (Dh^-0.25)^2 folded into Q only
    wq_t = (params["wq"].astype(f32) * scale2).T.astype(compute_dtype)   # (D, D)
    bq = (params["bq"].astype(f32) * scale2).reshape(1, D)
    wkv_t = jnp.concatenate([params["wk"].astype(f32).T,
                             params["wv"].astype(f32).T],
                            axis=1).astype(compute_dtype)                # (D, 2D)
    bkv = jnp.concatenate([jnp.zeros((D,), f32),
                           params["bv"].astype(f32)]).reshape(1, 2 * D)
    wo_t = params["wo"].astype(f32).T.astype(compute_dtype)              # (D, D)
    bo = params["bo"].astype(f32).reshape(1, D)
    x_c = x.astype(compute_dtype)

    def resident(shape):
        # Grid-invariant block: single-buffered (no double-buffer VMEM waste).
        return pl.BlockSpec(shape, lambda b, t, h: tuple(0 for _ in shape),
                            pipeline_mode=pl.Buffered(1))

    inputs = [x_c, wq_t, bq, wkv_t, bkv, wo_t, bo]
    in_specs = [
        pl.BlockSpec((1, T, D), lambda b, t, h: (b, 0, 0)),   # x (per batch)
        resident((D, D)),        # Wq^T (scaled)
        resident((1, D)),        # bq (scaled)
        resident((D, 2 * D)),    # [Wk^T | Wv^T]
        resident((1, 2 * D)),    # [0 | bv]
        resident((D, D)),        # Wo^T
        resident((1, D)),        # bo
    ]

    if causal:
        mask_mode = "causal"
    elif mask is not None:
        mask_mode = "input"
        inputs.append(mask[:T, :T].astype(f32))
        in_specs.append(pl.BlockSpec((Tq, T), lambda b, t, h: (t, 0)))
    else:
        mask_mode = "none"

    out_spec = pl.BlockSpec((1, Tq, D), lambda b, t, h: (b, t, 0))
    if return_qk:
        out_shape = (jax.ShapeDtypeStruct((B, T, D), out_dtype),
                     jax.ShapeDtypeStruct((B, H, T, T), f32))
        out_specs = (out_spec,
                     pl.BlockSpec((1, 1, Tq, T), lambda b, t, h: (b, h, t, 0)))
    else:
        out_shape = jax.ShapeDtypeStruct((B, T, D), out_dtype)
        out_specs = out_spec

    scratch_shapes = [
        pltpu.VMEM((H, Tq, Dh), compute_dtype),       # Q (all heads, this tile)
        pltpu.VMEM((2 * H, T, Dh), compute_dtype),    # K & V (all heads)
        pltpu.VMEM((H, Tq, Dh), jnp.float32),         # per-head wv (pre out-proj)
    ]

    # ----- explicit VMEM budget ----------------------------------------------
    if vmem_limit_bytes is None:
        vb = 2 * _padded_bytes((T, D), compute_dtype)           # x (double)
        for arr in (wq_t, bq, wkv_t, bkv, wo_t, bo):            # single-buffered
            vb += _padded_bytes(arr.shape, arr.dtype)
        if mask_mode == "input":
            vb += 2 * _padded_bytes((Tq, T), f32)
        vb += 2 * _padded_bytes((Tq, D), out_dtype)             # out (double)
        if return_qk:
            vb += 2 * _padded_bytes((Tq, T), f32)               # qk (double)
        vb += H * _padded_bytes((Tq, Dh), compute_dtype)        # q scratch
        vb += 2 * H * _padded_bytes((T, Dh), compute_dtype)     # kv scratch
        vb += H * _padded_bytes((Tq, Dh), jnp.float32)          # acc scratch
        vmem_limit_bytes = min(int(vb * 1.25) + (8 << 20), 128 << 20)

    dims = ("parallel",
            "parallel" if nt_parallel else "arbitrary",
            "arbitrary")

    kernel = functools.partial(_mha_kernel, D, Dh, mask_mode, bool(return_qk),
                               bool(nt_parallel), float(mask_value))

    res = pl.pallas_call(
        kernel,
        out_shape=out_shape,
        grid_spec=pltpu.PrefetchScalarGridSpec(
            num_scalar_prefetch=0,
            grid=(B, NT, H),
            in_specs=in_specs,
            out_specs=out_specs,
            scratch_shapes=scratch_shapes,
        ),
        compiler_params=pltpu.CompilerParams(
            dimension_semantics=dims,
            vmem_limit_bytes=int(vmem_limit_bytes)),
    )(*inputs)

    if return_qk:
        out, qk = res
        return out, qk
    return res, None


def init_params(key, n_state):
    ks = jax.random.split(key, 7)
    s = 1.0 / jnp.sqrt(n_state)
    return {
        "wq": jax.random.uniform(ks[0], (n_state, n_state), jnp.float32, -s, s),
        "bq": jax.random.uniform(ks[1], (n_state,), jnp.float32, -s, s),
        "wk": jax.random.uniform(ks[2], (n_state, n_state), jnp.float32, -s, s),
        "wv": jax.random.uniform(ks[3], (n_state, n_state), jnp.float32, -s, s),
        "bv": jax.random.uniform(ks[4], (n_state,), jnp.float32, -s, s),
        "wo": jax.random.uniform(ks[5], (n_state, n_state), jnp.float32, -s, s),
        "bo": jax.random.uniform(ks[6], (n_state,), jnp.float32, -s, s),
    }


def reference_mha(x, params, mask, n_head):
    """Pure-JAX reference mirroring the PyTorch module exactly."""
    B, T, D = x.shape
    H = n_head
    Dh = D // H
    scale = float(Dh) ** (-0.25)
    q = x @ params["wq"].T + params["bq"]
    k = x @ params["wk"].T
    v = x @ params["wv"].T + params["bv"]
    q = (q.reshape(B, T, H, Dh).transpose(0, 2, 1, 3)) * scale   # (B,H,T,Dh)
    k = (k.reshape(B, T, H, Dh).transpose(0, 2, 3, 1)) * scale   # (B,H,Dh,T)
    v = v.reshape(B, T, H, Dh).transpose(0, 2, 1, 3)             # (B,H,T,Dh)
    qk = jnp.einsum('bhtd,bhds->bhts', q, k)
    if mask is not None:
        qk = qk + mask[:T, :T]
    qk = qk.astype(jnp.float32)
    w = jax.nn.softmax(qk, axis=-1).astype(x.dtype)
    wv = jnp.einsum('bhts,bhsd->bhtd', w, v).transpose(0, 2, 1, 3).reshape(B, T, D)
    out = wv @ params["wo"].T + params["bo"]
    return out, qk


if __name__ == "__main__":
    B, T, D, H = 2, 16, 32, 4

    key = jax.random.PRNGKey(0)
    kx, kp = jax.random.split(key)
    x = jax.random.normal(kx, (B, T, D), jnp.float32)
    params = init_params(kp, D)

    # Whisper-style causal additive mask (finite large-negative for testing).
    mask = jnp.triu(jnp.full((T, T), -1e9, jnp.float32), k=1)

    out_gold, qk_gold = reference_mha(x, params, mask, H)

    # 1) f32 compute, explicit mask input, single query tile, qk returned.
    out1, qk1 = multi_head_attention(x, params, mask, n_head=H)
    jax.block_until_ready((out1, qk1))
    assert jnp.allclose(qk1, qk_gold, atol=5e-2, rtol=5e-2), "qk mismatch (f32)"
    assert jnp.allclose(out1, out_gold, atol=5e-2, rtol=5e-2), "out mismatch (f32)"

    # 2) f32 compute, in-kernel causal mask, query tiling (two q-tiles).
    out2, qk2 = multi_head_attention(x, params, None, n_head=H,
                                     causal=True, q_block=8)
    jax.block_until_ready((out2, qk2))
    assert jnp.allclose(qk2, qk_gold, atol=5e-2, rtol=5e-2), "qk mismatch (causal)"
    assert jnp.allclose(out2, out_gold, atol=5e-2, rtol=5e-2), "out mismatch (causal)"

    # 3) Perf path: bf16 MXU compute (f32 accumulation), qk dropped, tiled,
    #    query-tile axis marked megacore-parallel.
    out3, _ = multi_head_attention(x, params, mask, n_head=H, return_qk=False,
                                   compute_dtype=jnp.bfloat16, q_block=8,
                                   nt_parallel=True)
    out3 = jax.block_until_ready(out3)
    assert jnp.allclose(out3, out_gold, atol=1.5e-1, rtol=1.5e-1), "out mismatch (bf16)"

    print("KERNEL_OK")
</pallas_src>

<mosaic_0001>
module attributes {stable_mosaic.version = 11 : i64} {
  func.func @_mha_kernel(%arg0: i32, %arg1: i32, %arg2: i32, %arg3: memref<1x16x32xf32, #tpu.memory_space<vmem>>, %arg4: memref<32x32xf32, #tpu.memory_space<vmem>>, %arg5: memref<1x32xf32, #tpu.memory_space<vmem>>, %arg6: memref<32x64xf32, #tpu.memory_space<vmem>>, %arg7: memref<1x64xf32, #tpu.memory_space<vmem>>, %arg8: memref<32x32xf32, #tpu.memory_space<vmem>>, %arg9: memref<1x32xf32, #tpu.memory_space<vmem>>, %arg10: memref<16x16xf32, #tpu.memory_space<vmem>>, %arg11: memref<1x16x32xf32, #tpu.memory_space<vmem>>, %arg12: memref<1x1x16x16xf32, #tpu.memory_space<vmem>>, %arg13: memref<4x16x8xf32, #tpu.memory_space<vmem>>, %arg14: memref<8x16x8xf32, #tpu.memory_space<vmem>>, %arg15: memref<4x16x8xf32, #tpu.memory_space<vmem>>) attributes {dimension_semantics = [#tpu.dimension_semantics<parallel>, #tpu.dimension_semantics<arbitrary>, #tpu.dimension_semantics<arbitrary>], iteration_bounds = array<i64: 2, 1, 4>, scalar_prefetch = 0 : i64, scratch_operands = 3 : i64, tpu.core_type = #tpu.core_type<tc>, window_params = [{transform_indices = @transform_0, window_bounds = array<i64: 1, 16, 32>}, {pipeline_mode = #tpu.pipeline_mode<synchronous>, transform_indices = @transform_1, window_bounds = array<i64: 32, 32>}, {pipeline_mode = #tpu.pipeline_mode<synchronous>, transform_indices = @transform_2, window_bounds = array<i64: 1, 32>}, {pipeline_mode = #tpu.pipeline_mode<synchronous>, transform_indices = @transform_3, window_bounds = array<i64: 32, 64>}, {pipeline_mode = #tpu.pipeline_mode<synchronous>, transform_indices = @transform_4, window_bounds = array<i64: 1, 64>}, {pipeline_mode = #tpu.pipeline_mode<synchronous>, transform_indices = @transform_5, window_bounds = array<i64: 32, 32>}, {pipeline_mode = #tpu.pipeline_mode<synchronous>, transform_indices = @transform_6, window_bounds = array<i64: 1, 32>}, {transform_indices = @transform_7, window_bounds = array<i64: 16, 16>}, {transform_indices = @transform_8, window_bounds = array<i64: 1, 16, 32>}, {transform_indices = @transform_9, window_bounds = array<i64: 1, 1, 16, 16>}]} {
    %c0_i32 = arith.constant 0 : i32
    %0 = arith.cmpi eq, %arg1, %c0_i32 : i32
    %c0_i32_0 = arith.constant 0 : i32
    %1 = arith.cmpi eq, %arg2, %c0_i32_0 : i32
    %2 = arith.andi %0, %1 : i1
    %3 = arith.extui %2 : i1 to i32
    %c0_i32_1 = arith.constant 0 : i32
    %4 = arith.cmpi ne, %3, %c0_i32_1 : i32
    scf.if %4 {
      %c0_21 = arith.constant 0 : index
      %c0_22 = arith.constant 0 : index
      %c0_23 = arith.constant 0 : index
      %42 = vector.load %arg3[%c0_21, %c0_22, %c0_23] : memref<1x16x32xf32, #tpu.memory_space<vmem>>, vector<1x16x32xf32>
      %43 = vector.shape_cast %42 : vector<1x16x32xf32> to vector<16x32xf32>
      %c0_24 = arith.constant 0 : index
      %c0_25 = arith.constant 0 : index
      %44 = vector.load %arg6[%c0_24, %c0_25] : memref<32x64xf32, #tpu.memory_space<vmem>>, vector<32x64xf32>
      %cst_26 = arith.constant dense<0.000000e+00> : vector<16x64xf32>
      %45 = tpu.matmul %43, %44, %cst_26 {dimension_numbers = #tpu.dot_dimension_numbers<[1], [0], [0], [1], [0, 0, 1, 1], [], []>} : vector<16x32xf32>, vector<32x64xf32>, vector<16x64xf32> -> vector<16x64xf32>
      %c0_27 = arith.constant 0 : index
      %c0_28 = arith.constant 0 : index
      %46 = vector.load %arg7[%c0_27, %c0_28] : memref<1x64xf32, #tpu.memory_space<vmem>>, vector<1x64xf32>
      %47 = vector.broadcast %46 : vector<1x64xf32> to vector<16x64xf32>
      %48 = arith.addf %45, %47 : vector<16x64xf32>
      %49 = vector.extract_strided_slice %48 {offsets = [0, 0], sizes = [16, 8], strides = [1, 1]} : vector<16x64xf32> to vector<16x8xf32>
      %c0_29 = arith.constant 0 : index
      %c0_30 = arith.constant 0 : index
      %c0_31 = arith.constant 0 : index
      %50 = vector.load %arg14[%c0_29, %c0_30, %c0_31] : memref<8x16x8xf32, #tpu.memory_space<vmem>>, vector<1x16x8xf32>
      %51 = vector.shape_cast %50 : vector<1x16x8xf32> to vector<16x8xf32>
      %52 = vector.shape_cast %49 : vector<16x8xf32> to vector<1x16x8xf32>
      tpu.vector_store %arg14[%c0_29, %c0_30, %c0_31], %52 {strides = array<i32>} : memref<8x16x8xf32, #tpu.memory_space<vmem>>, vector<1x16x8xf32>,
      %53 = vector.extract_strided_slice %48 {offsets = [0, 32], sizes = [16, 8], strides = [1, 1]} : vector<16x64xf32> to vector<16x8xf32>
      %c4 = arith.constant 4 : index
      %c0_32 = arith.constant 0 : index
      %c0_33 = arith.constant 0 : index
      %54 = vector.load %arg14[%c4, %c0_32, %c0_33] : memref<8x16x8xf32, #tpu.memory_space<vmem>>, vector<1x16x8xf32>
      %55 = vector.shape_cast %54 : vector<1x16x8xf32> to vector<16x8xf32>
      %56 = vector.shape_cast %53 : vector<16x8xf32> to vector<1x16x8xf32>
      tpu.vector_store %arg14[%c4, %c0_32, %c0_33], %56 {strides = array<i32>} : memref<8x16x8xf32, #tpu.memory_space<vmem>>, vector<1x16x8xf32>,
      %57 = vector.extract_strided_slice %48 {offsets = [0, 8], sizes = [16, 8], strides = [1, 1]} : vector<16x64xf32> to vector<16x8xf32>
      %c1 = arith.constant 1 : index
      %c0_34 = arith.constant 0 : index
      %c0_35 = arith.constant 0 : index
      %58 = vector.load %arg14[%c1, %c0_34, %c0_35] : memref<8x16x8xf32, #tpu.memory_space<vmem>>, vector<1x16x8xf32>
      %59 = vector.shape_cast %58 : vector<1x16x8xf32> to vector<16x8xf32>
      %60 = vector.shape_cast %57 : vector<16x8xf32> to vector<1x16x8xf32>
      tpu.vector_store %arg14[%c1, %c0_34, %c0_35], %60 {strides = array<i32>} : memref<8x16x8xf32, #tpu.memory_space<vmem>>, vector<1x16x8xf32>,
      %61 = vector.extract_strided_slice %48 {offsets = [0, 40], sizes = [16, 8], strides = [1, 1]} : vector<16x64xf32> to vector<16x8xf32>
      %c5 = arith.constant 5 : index
      %c0_36 = arith.constant 0 : index
      %c0_37 = arith.constant 0 : index
      %62 = vector.load %arg14[%c5, %c0_36, %c0_37] : memref<8x16x8xf32, #tpu.memory_space<vmem>>, vector<1x16x8xf32>
      %63 = vector.shape_cast %62 : vector<1x16x8xf32> to vector<16x8xf32>
      %64 = vector.shape_cast %61 : vector<16x8xf32> to vector<1x16x8xf32>
      tpu.vector_store %arg14[%c5, %c0_36, %c0_37], %64 {strides = array<i32>} : memref<8x16x8xf32, #tpu.memory_space<vmem>>, vector<1x16x8xf32>,
      %65 = vector.extract_strided_slice %48 {offsets = [0, 16], sizes = [16, 8], strides = [1, 1]} : vector<16x64xf32> to vector<16x8xf32>
      %c2 = arith.constant 2 : index
      %c0_38 = arith.constant 0 : index
      %c0_39 = arith.constant 0 : index
      %66 = vector.load %arg14[%c2, %c0_38, %c0_39] : memref<8x16x8xf32, #tpu.memory_space<vmem>>, vector<1x16x8xf32>
      %67 = vector.shape_cast %66 : vector<1x16x8xf32> to vector<16x8xf32>
      %68 = vector.shape_cast %65 : vector<16x8xf32> to vector<1x16x8xf32>
      tpu.vector_store %arg14[%c2, %c0_38, %c0_39], %68 {strides = array<i32>} : memref<8x16x8xf32, #tpu.memory_space<vmem>>, vector<1x16x8xf32>,
      %69 = vector.extract_strided_slice %48 {offsets = [0, 48], sizes = [16, 8], strides = [1, 1]} : vector<16x64xf32> to vector<16x8xf32>
      %c6 = arith.constant 6 : index
      %c0_40 = arith.constant 0 : index
      %c0_41 = arith.constant 0 : index
      %70 = vector.load %arg14[%c6, %c0_40, %c0_41] : memref<8x16x8xf32, #tpu.memory_space<vmem>>, vector<1x16x8xf32>
      %71 = vector.shape_cast %70 : vector<1x16x8xf32> to vector<16x8xf32>
      %72 = vector.shape_cast %69 : vector<16x8xf32> to vector<1x16x8xf32>
      tpu.vector_store %arg14[%c6, %c0_40, %c0_41], %72 {strides = array<i32>} : memref<8x16x8xf32, #tpu.memory_space<vmem>>, vector<1x16x8xf32>,
      %73 = vector.extract_strided_slice %48 {offsets = [0, 24], sizes = [16, 8], strides = [1, 1]} : vector<16x64xf32> to vector<16x8xf32>
      %c3 = arith.constant 3 : index
      %c0_42 = arith.constant 0 : index
      %c0_43 = arith.constant 0 : index
      %74 = vector.load %arg14[%c3, %c0_42, %c0_43] : memref<8x16x8xf32, #tpu.memory_space<vmem>>, vector<1x16x8xf32>
      %75 = vector.shape_cast %74 : vector<1x16x8xf32> to vector<16x8xf32>
      %76 = vector.shape_cast %73 : vector<16x8xf32> to vector<1x16x8xf32>
      tpu.vector_store %arg14[%c3, %c0_42, %c0_43], %76 {strides = array<i32>} : memref<8x16x8xf32, #tpu.memory_space<vmem>>, vector<1x16x8xf32>,
      %77 = vector.extract_strided_slice %48 {offsets = [0, 56], sizes = [16, 8], strides = [1, 1]} : vector<16x64xf32> to vector<16x8xf32>
      %c7 = arith.constant 7 : index
      %c0_44 = arith.constant 0 : index
      %c0_45 = arith.constant 0 : index
      %78 = vector.load %arg14[%c7, %c0_44, %c0_45] : memref<8x16x8xf32, #tpu.memory_space<vmem>>, vector<1x16x8xf32>
      %79 = vector.shape_cast %78 : vector<1x16x8xf32> to vector<16x8xf32>
      %80 = vector.shape_cast %77 : vector<16x8xf32> to vector<1x16x8xf32>
      tpu.vector_store %arg14[%c7, %c0_44, %c0_45], %80 {strides = array<i32>} : memref<8x16x8xf32, #tpu.memory_space<vmem>>, vector<1x16x8xf32>,
    } else {
    }
    %c0_i32_2 = arith.constant 0 : i32
    %5 = arith.cmpi eq, %arg2, %c0_i32_2 : i32
    %6 = arith.extui %5 : i1 to i32
    %c0_i32_3 = arith.constant 0 : i32
    %7 = arith.cmpi ne, %6, %c0_i32_3 : i32
    scf.if %7 {
      %c16_i32 = arith.constant 16 : i32
      %42 = arith.muli %arg1, %c16_i32 : i32
      %43 = tpu.assume_multiple %42, 16 : i32
      %c0_21 = arith.constant 0 : index
      %44 = arith.index_cast %43 : i32 to index
      %c0_22 = arith.constant 0 : index
      %45 = vector.load %arg3[%c0_21, %44, %c0_22] : memref<1x16x32xf32, #tpu.memory_space<vmem>>, vector<1x16x32xf32>
      %46 = vector.shape_cast %45 : vector<1x16x32xf32> to vector<16x32xf32>
      %c0_23 = arith.constant 0 : index
      %c0_24 = arith.constant 0 : index
      %47 = vector.load %arg4[%c0_23, %c0_24] : memref<32x32xf32, #tpu.memory_space<vmem>>, vector<32x32xf32>
      %cst_25 = arith.constant dense<0.000000e+00> : vector<16x32xf32>
      %48 = tpu.matmul %46, %47, %cst_25 {dimension_numbers = #tpu.dot_dimension_numbers<[1], [0], [0], [1], [0, 0, 1, 1], [], []>} : vector<16x32xf32>, vector<32x32xf32>, vector<16x32xf32> -> vector<16x32xf32>
      %c0_26 = arith.constant 0 : index
      %c0_27 = arith.constant 0 : index
      %49 = vector.load %arg5[%c0_26, %c0_27] : memref<1x32xf32, #tpu.memory_space<vmem>>, vector<1x32xf32>
      %50 = vector.broadcast %49 : vector<1x32xf32> to vector<16x32xf32>
      %51 = arith.addf %48, %50 : vector<16x32xf32>
      %52 = vector.extract_strided_slice %51 {offsets = [0, 0], sizes = [16, 8], strides = [1, 1]} : vector<16x32xf32> to vector<16x8xf32>
      %c0_28 = arith.constant 0 : index
      %c0_29 = arith.constant 0 : index
      %c0_30 = arith.constant 0 : index
      %53 = vector.load %arg13[%c0_28, %c0_29, %c0_30] : memref<4x16x8xf32, #tpu.memory_space<vmem>>, vector<1x16x8xf32>
      %54 = vector.shape_cast %53 : vector<1x16x8xf32> to vector<16x8xf32>
      %55 = vector.shape_cast %52 : vector<16x8xf32> to vector<1x16x8xf32>
      tpu.vector_store %arg13[%c0_28, %c0_29, %c0_30], %55 {strides = array<i32>} : memref<4x16x8xf32, #tpu.memory_space<vmem>>, vector<1x16x8xf32>,
      %56 = vector.extract_strided_slice %51 {offsets = [0, 8], sizes = [16, 8], strides = [1, 1]} : vector<16x32xf32> to vector<16x8xf32>
      %c1 = arith.constant 1 : index
      %c0_31 = arith.constant 0 : index
      %c0_32 = arith.constant 0 : index
      %57 = vector.load %arg13[%c1, %c0_31, %c0_32] : memref<4x16x8xf32, #tpu.memory_space<vmem>>, vector<1x16x8xf32>
      %58 = vector.shape_cast %57 : vector<1x16x8xf32> to vector<16x8xf32>
      %59 = vector.shape_cast %56 : vector<16x8xf32> to vector<1x16x8xf32>
      tpu.vector_store %arg13[%c1, %c0_31, %c0_32], %59 {strides = array<i32>} : memref<4x16x8xf32, #tpu.memory_space<vmem>>, vector<1x16x8xf32>,
      %60 = vector.extract_strided_slice %51 {offsets = [0, 16], sizes = [16, 8], strides = [1, 1]} : vector<16x32xf32> to vector<16x8xf32>
      %c2 = arith.constant 2 : index
      %c0_33 = arith.constant 0 : index
      %c0_34 = arith.constant 0 : index
      %61 = vector.load %arg13[%c2, %c0_33, %c0_34] : memref<4x16x8xf32, #tpu.memory_space<vmem>>, vector<1x16x8xf32>
      %62 = vector.shape_cast %61 : vector<1x16x8xf32> to vector<16x8xf32>
      %63 = vector.shape_cast %60 : vector<16x8xf32> to vector<1x16x8xf32>
      tpu.vector_store %arg13[%c2, %c0_33, %c0_34], %63 {strides = array<i32>} : memref<4x16x8xf32, #tpu.memory_space<vmem>>, vector<1x16x8xf32>,
      %64 = vector.extract_strided_slice %51 {offsets = [0, 24], sizes = [16, 8], strides = [1, 1]} : vector<16x32xf32> to vector<16x8xf32>
      %c3 = arith.constant 3 : index
      %c0_35 = arith.constant 0 : index
      %c0_36 = arith.constant 0 : index
      %65 = vector.load %arg13[%c3, %c0_35, %c0_36] : memref<4x16x8xf32, #tpu.memory_space<vmem>>, vector<1x16x8xf32>
      %66 = vector.shape_cast %65 : vector<1x16x8xf32> to vector<16x8xf32>
      %67 = vector.shape_cast %64 : vector<16x8xf32> to vector<1x16x8xf32>
      tpu.vector_store %arg13[%c3, %c0_35, %c0_36], %67 {strides = array<i32>} : memref<4x16x8xf32, #tpu.memory_space<vmem>>, vector<1x16x8xf32>,
    } else {
    }
    %8 = arith.index_cast %arg2 : i32 to index
    %c0 = arith.constant 0 : index
    %c0_4 = arith.constant 0 : index
    %9 = vector.load %arg13[%8, %c0, %c0_4] : memref<4x16x8xf32, #tpu.memory_space<vmem>>, vector<1x16x8xf32>
    %10 = vector.shape_cast %9 : vector<1x16x8xf32> to vector<16x8xf32>
    %11 = arith.index_cast %arg2 : i32 to index
    %c0_5 = arith.constant 0 : index
    %c0_6 = arith.constant 0 : index
    %12 = vector.load %arg14[%11, %c0_5, %c0_6] : memref<8x16x8xf32, #tpu.memory_space<vmem>>, vector<1x16x8xf32>
    %13 = vector.shape_cast %12 : vector<1x16x8xf32> to vector<16x8xf32>
    %c4_i32 = arith.constant 4 : i32
    %14 = arith.addi %c4_i32, %arg2 : i32
    %15 = arith.index_cast %14 : i32 to index
    %c0_7 = arith.constant 0 : index
    %c0_8 = arith.constant 0 : index
    %16 = vector.load %arg14[%15, %c0_7, %c0_8] : memref<8x16x8xf32, #tpu.memory_space<vmem>>, vector<1x16x8xf32>
    %17 = vector.shape_cast %16 : vector<1x16x8xf32> to vector<16x8xf32>
    %cst = arith.constant dense<0.000000e+00> : vector<16x16xf32>
    %18 = tpu.matmul %10, %13, %cst {dimension_numbers = #tpu.dot_dimension_numbers<[1], [1], [0], [0], [0, 0, 1, 0], [], []>} : vector<16x8xf32>, vector<16x8xf32>, vector<16x16xf32> -> vector<16x16xf32>
    %c0_9 = arith.constant 0 : index
    %c0_10 = arith.constant 0 : index
    %19 = vector.load %arg10[%c0_9, %c0_10] : memref<16x16xf32, #tpu.memory_space<vmem>>, vector<16x16xf32>
    %20 = arith.addf %18, %19 : vector<16x16xf32>
    %c0_11 = arith.constant 0 : index
    %c0_12 = arith.constant 0 : index
    %c0_13 = arith.constant 0 : index
    %c0_14 = arith.constant 0 : index
    %21 = vector.load %arg12[%c0_11, %c0_12, %c0_13, %c0_14] : memref<1x1x16x16xf32, #tpu.memory_space<vmem>>, vector<1x1x16x16xf32>
    %22 = vector.shape_cast %21 : vector<1x1x16x16xf32> to vector<16x16xf32>
    %23 = vector.shape_cast %20 : vector<16x16xf32> to vector<1x1x16x16xf32>
    tpu.vector_store %arg12[%c0_11, %c0_12, %c0_13, %c0_14], %23 {strides = array<i32>} : memref<1x1x16x16xf32, #tpu.memory_space<vmem>>, vector<1x1x16x16xf32>,
    %cst_15 = arith.constant dense<0xFF800000> : vector<16xf32>
    %24 = vector.multi_reduction <maximumf>, %20, %cst_15 [1] : vector<16x16xf32> to vector<16xf32>
    %25 = vector.shape_cast %24 : vector<16xf32> to vector<16x1xf32>
    %26 = vector.broadcast %25 : vector<16x1xf32> to vector<16x16xf32>
    %27 = arith.subf %20, %26 : vector<16x16xf32>
    %28 = math.exp %27 : vector<16x16xf32>
    %cst_16 = arith.constant dense<0.000000e+00> : vector<16xf32>
    %29 = vector.multi_reduction <add>, %28, %cst_16 [1] : vector<16x16xf32> to vector<16xf32>
    %30 = vector.shape_cast %29 : vector<16xf32> to vector<16x1xf32>
    %31 = tpu.reciprocal %30 {approx = true} : vector<16x1xf32> -> vector<16x1xf32>
    %32 = vector.broadcast %31 : vector<16x1xf32> to vector<16x16xf32>
    %33 = arith.mulf %28, %32 : vector<16x16xf32>
    %cst_17 = arith.constant dense<0.000000e+00> : vector<16x8xf32>
    %34 = tpu.matmul %33, %17, %cst_17 {dimension_numbers = #tpu.dot_dimension_numbers<[1], [0], [0], [1], [0, 0, 1, 1], [], []>} : vector<16x16xf32>, vector<16x8xf32>, vector<16x8xf32> -> vector<16x8xf32>
    %35 = arith.index_cast %arg2 : i32 to index
    %c0_18 = arith.constant 0 : index
    %c0_19 = arith.constant 0 : index
    %36 = vector.load %arg15[%35, %c0_18, %c0_19] : memref<4x16x8xf32, #tpu.memory_space<vmem>>, vector<1x16x8xf32>
    %37 = vector.shape_cast %36 : vector<1x16x8xf32> to vector<16x8xf32>
    %38 = vector.shape_cast %34 : vector<16x8xf32> to vector<1x16x8xf32>
    tpu.vector_store %arg15[%35, %c0_18, %c0_19], %38 {strides = array<i32>} : memref<4x16x8xf32, #tpu.memory_space<vmem>>, vector<1x16x8xf32>,
    %c3_i32 = arith.constant 3 : i32
    %39 = arith.cmpi eq, %arg2, %c3_i32 : i32
    %40 = arith.extui %39 : i1 to i32
    %c0_i32_20 = arith.constant 0 : i32
    %41 = arith.cmpi ne, %40, %c0_i32_20 : i32
    scf.if %41 {
      %c0_21 = arith.constant 0 : index
      %c0_22 = arith.constant 0 : index
      %c0_23 = arith.constant 0 : index
      %42 = vector.load %arg15[%c0_21, %c0_22, %c0_23] : memref<4x16x8xf32, #tpu.memory_space<vmem>>, vector<1x16x8xf32>
      %43 = vector.shape_cast %42 : vector<1x16x8xf32> to vector<16x8xf32>
      %c1 = arith.constant 1 : index
      %c0_24 = arith.constant 0 : index
      %c0_25 = arith.constant 0 : index
      %44 = vector.load %arg15[%c1, %c0_24, %c0_25] : memref<4x16x8xf32, #tpu.memory_space<vmem>>, vector<1x16x8xf32>
      %45 = vector.shape_cast %44 : vector<1x16x8xf32> to vector<16x8xf32>
      %c2 = arith.constant 2 : index
      %c0_26 = arith.constant 0 : index
      %c0_27 = arith.constant 0 : index
      %46 = vector.load %arg15[%c2, %c0_26, %c0_27] : memref<4x16x8xf32, #tpu.memory_space<vmem>>, vector<1x16x8xf32>
      %47 = vector.shape_cast %46 : vector<1x16x8xf32> to vector<16x8xf32>
      %c3 = arith.constant 3 : index
      %c0_28 = arith.constant 0 : index
      %c0_29 = arith.constant 0 : index
      %48 = vector.load %arg15[%c3, %c0_28, %c0_29] : memref<4x16x8xf32, #tpu.memory_space<vmem>>, vector<1x16x8xf32>
      %49 = vector.shape_cast %48 : vector<1x16x8xf32> to vector<16x8xf32>
      %50 = tpu.concatenate %43, %45, %47, %49 in 1 : vector<16x8xf32>, vector<16x8xf32>, vector<16x8xf32>, vector<16x8xf32> -> vector<16x32xf32>
      %c0_30 = arith.constant 0 : index
      %c0_31 = arith.constant 0 : index
      %51 = vector.load %arg8[%c0_30, %c0_31] : memref<32x32xf32, #tpu.memory_space<vmem>>, vector<32x32xf32>
      %cst_32 = arith.constant dense<0.000000e+00> : vector<16x32xf32>
      %52 = tpu.matmul %50, %51, %cst_32 {dimension_numbers = #tpu.dot_dimension_numbers<[1], [0], [0], [1], [0, 0, 1, 1], [], []>} : vector<16x32xf32>, vector<32x32xf32>, vector<16x32xf32> -> vector<16x32xf32>
      %c0_33 = arith.constant 0 : index
      %c0_34 = arith.constant 0 : index
      %53 = vector.load %arg9[%c0_33, %c0_34] : memref<1x32xf32, #tpu.memory_space<vmem>>, vector<1x32xf32>
      %54 = vector.broadcast %53 : vector<1x32xf32> to vector<16x32xf32>
      %55 = arith.addf %52, %54 : vector<16x32xf32>
      %c0_35 = arith.constant 0 : index
      %c0_36 = arith.constant 0 : index
      %c0_37 = arith.constant 0 : index
      %56 = vector.load %arg11[%c0_35, %c0_36, %c0_37] : memref<1x16x32xf32, #tpu.memory_space<vmem>>, vector<1x16x32xf32>
      %57 = vector.shape_cast %56 : vector<1x16x32xf32> to vector<16x32xf32>
      %58 = vector.shape_cast %55 : vector<16x32xf32> to vector<1x16x32xf32>
      tpu.vector_store %arg11[%c0_35, %c0_36, %c0_37], %58 {strides = array<i32>} : memref<1x16x32xf32, #tpu.memory_space<vmem>>, vector<1x16x32xf32>,
    } else {
    }
    return
  }
  func.func @transform_0(%arg0: i32, %arg1: i32, %arg2: i32) -> (i32, i32, i32) {
    %c0_i32 = arith.constant 0 : i32
    %c0_i32_0 = arith.constant 0 : i32
    %c0_i32_1 = arith.constant 0 : i32
    return %arg0, %c0_i32, %c0_i32_0 : i32, i32, i32
  }
  func.func @transform_1(%arg0: i32, %arg1: i32, %arg2: i32) -> (i32, i32) {
    %c0_i32 = arith.constant 0 : i32
    %c0_i32_0 = arith.constant 0 : i32
    %c0_i32_1 = arith.constant 0 : i32
    return %c0_i32, %c0_i32_0 : i32, i32
  }
  func.func @transform_2(%arg0: i32, %arg1: i32, %arg2: i32) -> (i32, i32) {
    %c0_i32 = arith.constant 0 : i32
    %c0_i32_0 = arith.constant 0 : i32
    %c0_i32_1 = arith.constant 0 : i32
    return %c0_i32, %c0_i32_0 : i32, i32
  }
  func.func @transform_3(%arg0: i32, %arg1: i32, %arg2: i32) -> (i32, i32) {
    %c0_i32 = arith.constant 0 : i32
    %c0_i32_0 = arith.constant 0 : i32
    %c0_i32_1 = arith.constant 0 : i32
    return %c0_i32, %c0_i32_0 : i32, i32
  }
  func.func @transform_4(%arg0: i32, %arg1: i32, %arg2: i32) -> (i32, i32) {
    %c0_i32 = arith.constant 0 : i32
    %c0_i32_0 = arith.constant 0 : i32
    %c0_i32_1 = arith.constant 0 : i32
    return %c0_i32, %c0_i32_0 : i32, i32
  }
  func.func @transform_5(%arg0: i32, %arg1: i32, %arg2: i32) -> (i32, i32) {
    %c0_i32 = arith.constant 0 : i32
    %c0_i32_0 = arith.constant 0 : i32
    %c0_i32_1 = arith.constant 0 : i32
    return %c0_i32, %c0_i32_0 : i32, i32
  }
  func.func @transform_6(%arg0: i32, %arg1: i32, %arg2: i32) -> (i32, i32) {
    %c0_i32 = arith.constant 0 : i32
    %c0_i32_0 = arith.constant 0 : i32
    %c0_i32_1 = arith.constant 0 : i32
    return %c0_i32, %c0_i32_0 : i32, i32
  }
  func.func @transform_7(%arg0: i32, %arg1: i32, %arg2: i32) -> (i32, i32) {
    %c0_i32 = arith.constant 0 : i32
    %c0_i32_0 = arith.constant 0 : i32
    return %arg1, %c0_i32 : i32, i32
  }
  func.func @transform_8(%arg0: i32, %arg1: i32, %arg2: i32) -> (i32, i32, i32) {
    %c0_i32 = arith.constant 0 : i32
    %c0_i32_0 = arith.constant 0 : i32
    return %arg0, %arg1, %c0_i32 : i32, i32, i32
  }
  func.func @transform_9(%arg0: i32, %arg1: i32, %arg2: i32) -> (i32, i32, i32, i32) {
    %c0_i32 = arith.constant 0 : i32
    %c0_i32_0 = arith.constant 0 : i32
    return %arg0, %arg2, %arg1, %c0_i32 : i32, i32, i32, i32
  }
}

</mosaic_0001>

<llo_original>
// kernel: tpu_custom_call.1
$region0: #{tpu_custom_call.1}
  #allocation0 [shape = 'u32[]', space=smem, size = 0x4, offset = 0x4, fixed_abs, tag = 'smem constant byte address 0x4 - core index']
  #allocation1 [shape = 'u32[144,128]{1,0:T(1,128)}', space=vmem, size = 0x12000, scoped, tag = 'internal scratch']
  #allocation2 [shape = 'f32[4,16,8]{2,1,0:T(8,128)}', space=vmem, size = 0x8000, scoped, tag = 'scratch operand']
  #allocation3 [shape = 'f32[8,16,8]{2,1,0:T(8,128)}', space=vmem, size = 0x10000, scoped, tag = 'scratch operand']
  #allocation4 [shape = 'f32[4,16,8]{2,1,0:T(8,128)}', space=vmem, size = 0x8000, scoped, tag = 'scratch operand']
  %s0 = inlined_call_operand.hbm [shape: f32[2,16,32], index: 0, kind: input, shape index: {}]
  %s1 = inlined_call_operand.hbm [shape: f32[32,32], index: 1, kind: input, shape index: {}]
  %s2 = inlined_call_operand.vmem [shape: f32[1,32], index: 2, kind: input, shape index: {}]
  %s3 = inlined_call_operand.hbm [shape: f32[32,64], index: 3, kind: input, shape index: {}]
  %s4 = inlined_call_operand.vmem [shape: f32[1,64], index: 4, kind: input, shape index: {}]
  %s5 = inlined_call_operand.hbm [shape: f32[32,32], index: 5, kind: input, shape index: {}]
  %s6 = inlined_call_operand.vmem [shape: f32[1,32], index: 6, kind: input, shape index: {}]
  %s7 = inlined_call_operand.vmem [shape: f32[16,16], index: 7, kind: input, shape index: {}]
  %s8 = inlined_call_operand.hbm [shape: f32[2,16,32], index: 8, kind: output, shape index: {0}]
  %s9 = inlined_call_operand.hbm [shape: f32[2,4,16,16], index: 9, kind: output, shape index: {1}]
  %10 = xla_tuple %s8, %s9
  %s11 = sld [smem:[#allocation0]]
  $region101: #{tpu_custom_call.1} parent=0
    _
  %s13 = ssub.s32 1, %s11
  %s14 = scalar_select 0, %s13, %s11
  $region1: #{tpu_custom_call.1} parent=0
    #allocation5 [shape = 'u8[16384]{0}', space=vmem, size = 0x4000, scoped, tag = 'input window, operand 0']
    #allocation6 [shape = 's32[2]{0}', space=sflag, size = 0x8, scoped, tag = 'scoped memory for tpu_custom_call.1']
    #allocation7 [shape = 's32[2]{0}', space=sflag, size = 0x8, scoped, tag = 'scoped memory for tpu_custom_call.1']
    #allocation8 [shape = 'u8[16384]{0}', space=vmem, size = 0x4000, scoped, tag = 'input window, operand 1, single buffered']
    #allocation9 [shape = 's32[1]{0}', space=sflag, size = 0x4, scoped, tag = 'scoped memory for tpu_custom_call.1']
    #allocation10 [shape = 'u8[16384]{0}', space=vmem, size = 0x4000, scoped, tag = 'input window, operand 3, single buffered']
    #allocation11 [shape = 'u8[16384]{0}', space=vmem, size = 0x4000, scoped, tag = 'input window, operand 5, single buffered']
    #allocation12 [shape = 's32[1]{0}', space=sflag, size = 0x4, scoped, tag = 'scoped memory for tpu_custom_call.1']
    #allocation13 [shape = 'u8[16384]{0}', space=vmem, size = 0x4000, scoped, tag = 'output window, operand 0']
    #allocation14 [shape = 'u8[16384]{0}', space=vmem, size = 0x4000, scoped, tag = 'output window, operand 1']
    #allocation15 [shape = 's32[2]{0}', space=sflag, size = 0x8, scoped, tag = 'scoped memory for tpu_custom_call.1']
    %15 = vsyncpa [#allocation6], 0
    %s16 = scalar_lea.sflag [#allocation6], 1
    %17 = vsyncpa %s16, 0
    %18 = vsyncpa [#allocation9], 0
    %19 = vsyncpa [#allocation12], 0
    %20 = vsyncpa [#allocation7], 0
    %s21 = scalar_lea.sflag [#allocation7], 1
    %22 = vsyncpa %s21, 0
    %23 = vsyncpa [#allocation15], 0
    %s24 = scalar_lea.sflag [#allocation15], 1
    %25 = vsyncpa %s24, 0
    loop: start=0, step=1, limit=10
    $region2: #{tpu_custom_call.1} parent=1 // loop_pre_header
      _
    $region3: #{tpu_custom_call.1} parent=1 // loop_header
      %s27 = sphi 0, %s31
      %p28 = scmp.ge.s32.totalorder %s27, 10
      %s34 = sphi 0, %s53
      %s35 = sphi 0, %s49
      %s36 = sphi 0, %s45
      %s37 = sphi 0, %s34
      %s38 = sphi 0, %s35
      %s39 = sphi 0, %s36
      %s40 = sphi 0, %s37
      %s41 = sphi 0, %s38
      %s42 = sphi 0, %s39
      %s56 = sphi 0, %s58
      %s59 = sphi 0, %s56
      %s60 = sphi 0, %s59
      %s76 = sphi 0, %s60
      %s80 = sphi 0, %s80
      %s82 = sphi 0, %s80
      %s83 = sphi 0, %s82
      %s97 = sphi 0, %s83
      %s101 = sphi 0, %s101
      %s103 = sphi 0, %s101
      %s104 = sphi 0, %s103
      %s118 = sphi 0, %s104
      %s122 = sphi 0, %s122
      %s124 = sphi 0, %s122
      %s125 = sphi 0, %s124
      %s139 = sphi 0, %s125
      %s143 = sphi 0, %s143
      %s145 = sphi 0, %s143
      %s146 = sphi 0, %s145
      %s160 = sphi 0, %s146
      %s164 = sphi 0, %s164
      %s166 = sphi 0, %s164
      %s167 = sphi 0, %s166
      %s181 = sphi 0, %s167
      %s185 = sphi 0, %s185
      %s187 = sphi 0, %s185
      %s188 = sphi 0, %s187
      %s202 = sphi 0, %s188
      %s208 = sphi 0, %s210
      %s211 = sphi 0, %s208
      %s212 = sphi 0, %s211
      %s228 = sphi 0, %s212
      %s236 = sphi 0, %s238
      %s239 = sphi 0, %s236
      %s240 = sphi 0, %s239
      %s256 = sphi 0, %s240
      %s266 = sphi 0, %s268
      %s269 = sphi 0, %s266
      %s270 = sphi 0, %s269
      %s286 = sphi 0, %s270
    $region4: #{tpu_custom_call.1} parent=1 // loop_header_branch
      %30 = sbr.rel (%p28) target = $region8
    $region5: #{tpu_custom_call.1} parent=1 // loop_body
      %s32 = ssub.s32 %s27, 1
      %s33 = ssub.s32 %s27, 2
      %s43 = sadd.s32 1, %s36
      %p44 = scmp.ge.s32.totalorder %s43, 4
      %s45 = scalar_select %p44, 0, %s43
      %s46 = sadd.s32 1, %s35
      %s47 = scalar_select %p44, %s46, %s35
      %p48 = scmp.ge.s32.totalorder %s47, 1
      %s49 = scalar_select %p48, 0, %s47
      %s50 = sadd.s32 1, %s34
      %s51 = scalar_select %p48, %s50, %s34
      %p52 = scmp.ge.s32.totalorder %s51, 2
      %s53 = scalar_select %p52, 0, %s51
      %s54 = ssub.s32 %s34, %s53
      %p55 = scmp.eq.s32.totalorder %s54, 0
      %s57 = sadd.s32 %s56, 1
      %s58 = scalar_select %p55, %s56, %s57
      %p61 = pneg %p55
      %p62 = scmp.eq.s32.totalorder %s27, 7
      %p63 = por %p61, %p62
      %p64 = scmp.ne.s32.totalorder %s56, %s59
      %p65 = scmp.eq.s32.totalorder %s27, 0
      %p66 = por %p64, %p65
      %p67 = scmp.ne.s32.totalorder %s56, %s59
      %p68 = scmp.eq.s32.totalorder %s32, 7
      %p69 = por %p67, %p68
      %p70 = scmp.ne.s32.totalorder %s59, %s60
      %p71 = scmp.eq.s32.totalorder %s32, 0
      %p72 = por %p70, %p71
      %p73 = scmp.ne.s32.totalorder %s59, %s60
      %p74 = scmp.eq.s32.totalorder %s33, 7
      %p75 = por %p73, %p74
      %p77 = scmp.ne.s32.totalorder %s60, %s76
      %p78 = scmp.eq.s32.totalorder %s33, 0
      %p79 = por %p77, %p78
      %s81 = sadd.s32 %s80, 1
      %p84 = scmp.eq.s32.totalorder %s27, 7
      %p85 = scmp.ne.s32.totalorder %s80, %s82
      %p86 = scmp.eq.s32.totalorder %s27, 0
      %p87 = por %p85, %p86
      %p88 = scmp.ne.s32.totalorder %s80, %s82
      %p89 = scmp.eq.s32.totalorder %s32, 7
      %p90 = por %p88, %p89
      %p91 = scmp.ne.s32.totalorder %s82, %s83
      %p92 = scmp.eq.s32.totalorder %s32, 0
      %p93 = por %p91, %p92
      %p94 = scmp.ne.s32.totalorder %s82, %s83
      %p95 = scmp.eq.s32.totalorder %s33, 7
      %p96 = por %p94, %p95
      %p98 = scmp.ne.s32.totalorder %s83, %s97
      %p99 = scmp.eq.s32.totalorder %s33, 0
      %p100 = por %p98, %p99
      %s102 = sadd.s32 %s101, 1
      %p105 = scmp.eq.s32.totalorder %s27, 7
      %p106 = scmp.ne.s32.totalorder %s101, %s103
      %p107 = scmp.eq.s32.totalorder %s27, 0
      %p108 = por %p106, %p107
      %p109 = scmp.ne.s32.totalorder %s101, %s103
      %p110 = scmp.eq.s32.totalorder %s32, 7
      %p111 = por %p109, %p110
      %p112 = scmp.ne.s32.totalorder %s103, %s104
      %p113 = scmp.eq.s32.totalorder %s32, 0
      %p114 = por %p112, %p113
      %p115 = scmp.ne.s32.totalorder %s103, %s104
      %p116 = scmp.eq.s32.totalorder %s33, 7
      %p117 = por %p115, %p116
      %p119 = scmp.ne.s32.totalorder %s104, %s118
      %p120 = scmp.eq.s32.totalorder %s33, 0
      %p121 = por %p119, %p120
      %s123 = sadd.s32 %s122, 1
      %p126 = scmp.eq.s32.totalorder %s27, 7
      %p127 = scmp.ne.s32.totalorder %s122, %s124
      %p128 = scmp.eq.s32.totalorder %s27, 0
      %p129 = por %p127, %p128
      %p130 = scmp.ne.s32.totalorder %s122, %s124
      %p131 = scmp.eq.s32.totalorder %s32, 7
      %p132 = por %p130, %p131
      %p133 = scmp.ne.s32.totalorder %s124, %s125
      %p134 = scmp.eq.s32.totalorder %s32, 0
      %p135 = por %p133, %p134
      %p136 = scmp.ne.s32.totalorder %s124, %s125
      %p137 = scmp.eq.s32.totalorder %s33, 7
      %p138 = por %p136, %p137
      %p140 = scmp.ne.s32.totalorder %s125, %s139
      %p141 = scmp.eq.s32.totalorder %s33, 0
      %p142 = por %p140, %p141
      %s144 = sadd.s32 %s143, 1
      %p147 = scmp.eq.s32.totalorder %s27, 7
      %p148 = scmp.ne.s32.totalorder %s143, %s145
      %p149 = scmp.eq.s32.totalorder %s27, 0
      %p150 = por %p148, %p149
      %p151 = scmp.ne.s32.totalorder %s143, %s145
      %p152 = scmp.eq.s32.totalorder %s32, 7
      %p153 = por %p151, %p152
      %p154 = scmp.ne.s32.totalorder %s145, %s146
      %p155 = scmp.eq.s32.totalorder %s32, 0
      %p156 = por %p154, %p155
      %p157 = scmp.ne.s32.totalorder %s145, %s146
      %p158 = scmp.eq.s32.totalorder %s33, 7
      %p159 = por %p157, %p158
      %p161 = scmp.ne.s32.totalorder %s146, %s160
      %p162 = scmp.eq.s32.totalorder %s33, 0
      %p163 = por %p161, %p162
      %s165 = sadd.s32 %s164, 1
      %p168 = scmp.eq.s32.totalorder %s27, 7
      %p169 = scmp.ne.s32.totalorder %s164, %s166
      %p170 = scmp.eq.s32.totalorder %s27, 0
      %p171 = por %p169, %p170
      %p172 = scmp.ne.s32.totalorder %s164, %s166
      %p173 = scmp.eq.s32.totalorder %s32, 7
      %p174 = por %p172, %p173
      %p175 = scmp.ne.s32.totalorder %s166, %s167
      %p176 = scmp.eq.s32.totalorder %s32, 0
      %p177 = por %p175, %p176
      %p178 = scmp.ne.s32.totalorder %s166, %s167
      %p179 = scmp.eq.s32.totalorder %s33, 7
      %p180 = por %p178, %p179
      %p182 = scmp.ne.s32.totalorder %s167, %s181
      %p183 = scmp.eq.s32.totalorder %s33, 0
      %p184 = por %p182, %p183
      %s186 = sadd.s32 %s185, 1
      %p189 = scmp.eq.s32.totalorder %s27, 7
      %p190 = scmp.ne.s32.totalorder %s185, %s187
      %p191 = scmp.eq.s32.totalorder %s27, 0
      %p192 = por %p190, %p191
      %p193 = scmp.ne.s32.totalorder %s185, %s187
      %p194 = scmp.eq.s32.totalorder %s32, 7
      %p195 = por %p193, %p194
      %p196 = scmp.ne.s32.totalorder %s187, %s188
      %p197 = scmp.eq.s32.totalorder %s32, 0
      %p198 = por %p196, %p197
      %p199 = scmp.ne.s32.totalorder %s187, %s188
      %p200 = scmp.eq.s32.totalorder %s33, 7
      %p201 = por %p199, %p200
      %p203 = scmp.ne.s32.totalorder %s188, %s202
      %p204 = scmp.eq.s32.totalorder %s33, 0
      %p205 = por %p203, %p204
      %s206 = ssub.s32 %s35, %s49
      %p207 = scmp.eq.s32.totalorder %s206, 0
      %s209 = sadd.s32 %s208, 1
      %s210 = scalar_select %p207, %s208, %s209
      %p213 = pneg %p207
      %p214 = scmp.eq.s32.totalorder %s27, 7
      %p215 = por %p213, %p214
      %p216 = scmp.ne.s32.totalorder %s208, %s211
      %p217 = scmp.eq.s32.totalorder %s27, 0
      %p218 = por %p216, %p217
      %p219 = scmp.ne.s32.totalorder %s208, %s211
      %p220 = scmp.eq.s32.totalorder %s32, 7
      %p221 = por %p219, %p220
      %p222 = scmp.ne.s32.totalorder %s211, %s212
      %p223 = scmp.eq.s32.totalorder %s32, 0
      %p224 = por %p222, %p223
      %p225 = scmp.ne.s32.totalorder %s211, %s212
      %p226 = scmp.eq.s32.totalorder %s33, 7
      %p227 = por %p225, %p226
      %p229 = scmp.ne.s32.totalorder %s212, %s228
      %p230 = scmp.eq.s32.totalorder %s33, 0
      %p231 = por %p229, %p230
      %s232 = ssub.s32 %s34, %s53
      %s233 = ssub.s32 %s35, %s49
      %s234 = sor.u32 %s232, %s233
      %p235 = scmp.eq.s32.totalorder %s234, 0
      %s237 = sadd.s32 %s236, 1
      %s238 = scalar_select %p235, %s236, %s237
      %p241 = pneg %p235
      %p242 = scmp.eq.s32.totalorder %s27, 7
      %p243 = por %p241, %p242
      %p244 = scmp.ne.s32.totalorder %s236, %s239
      %p245 = scmp.eq.s32.totalorder %s27, 0
      %p246 = por %p244, %p245
      %p247 = scmp.ne.s32.totalorder %s236, %s239
      %p248 = scmp.eq.s32.totalorder %s32, 7
      %p249 = por %p247, %p248
      %p250 = scmp.ne.s32.totalorder %s239, %s240
      %p251 = scmp.eq.s32.totalorder %s32, 0
      %p252 = por %p250, %p251
      %p253 = scmp.ne.s32.totalorder %s239, %s240
      %p254 = scmp.eq.s32.totalorder %s33, 7
      %p255 = por %p253, %p254
      %p257 = scmp.ne.s32.totalorder %s240, %s256
      %p258 = scmp.eq.s32.totalorder %s33, 0
      %p259 = por %p257, %p258
      %s260 = ssub.s32 %s34, %s53
      %s261 = ssub.s32 %s36, %s45
      %s262 = sor.u32 %s260, %s261
      %s263 = ssub.s32 %s35, %s49
      %s264 = sor.u32 %s262, %s263
      %p265 = scmp.eq.s32.totalorder %s264, 0
      %s267 = sadd.s32 %s266, 1
      %s268 = scalar_select %p265, %s266, %s267
      %p271 = pneg %p265
      %p272 = scmp.eq.s32.totalorder %s27, 7
      %p273 = por %p271, %p272
      %p274 = scmp.ne.s32.totalorder %s266, %s269
      %p275 = scmp.eq.s32.totalorder %s27, 0
      %p276 = por %p274, %p275
      %p277 = scmp.ne.s32.totalorder %s266, %s269
      %p278 = scmp.eq.s32.totalorder %s32, 7
      %p279 = por %p277, %p278
      %p280 = scmp.ne.s32.totalorder %s269, %s270
      %p281 = scmp.eq.s32.totalorder %s32, 0
      %p282 = por %p280, %p281
      %p283 = scmp.ne.s32.totalorder %s269, %s270
      %p284 = scmp.eq.s32.totalorder %s33, 7
      %p285 = por %p283, %p284
      %p287 = scmp.ne.s32.totalorder %s270, %s286
      %p288 = scmp.eq.s32.totalorder %s33, 0
      %p289 = por %p287, %p288
      %p290 = scmp.le.s32.totalorder 1, %s27
      %p291 = scmp.lt.s32.totalorder %s27, 9
      %p292 = pnand %p290, %p291
      %p293 = pneg %p292
      // Predicated region
      $region9: #{tpu_custom_call.1} parent=5 // pred_check
        _
      $region10: #{tpu_custom_call.1} parent=5 // pred_check_branch
        %295 = sbr.rel (%p292) target = $region12
      $region11: #{tpu_custom_call.1} parent=5 // pred_region
        %s296 = ssub.s32 %s27, 1
        // Predicated region
        $region13: #{tpu_custom_call.1} parent=11 // pred_check
          %p297 = pneg %p93
        $region14: #{tpu_custom_call.1} parent=11 // pred_check_branch
          %299 = sbr.rel (%p297) target = $region16
        $region15: #{tpu_custom_call.1} parent=11 // pred_region
          %s301 = ssub.s32 512, 512
          %302 = vsyncadd [#allocation9], %s301
          %s303 = sshll.u32 [#allocation8], 4
          %s304 = int_to_ptr.vmem [resolvable:$true] %s303
          %309 = dma.hbm_to_vmem [thread:$0]  %s1, 512, %s304, [#allocation9], 128, 128, 8
        $region16: #{tpu_custom_call.1} parent=11 // pred_fallthru
          _
        // Predicated region
        $region17: #{tpu_custom_call.1} parent=11 // pred_check
          %p310 = pneg %p114
        $region18: #{tpu_custom_call.1} parent=11 // pred_check_branch
          %312 = sbr.rel (%p310) target = $region20
        $region19: #{tpu_custom_call.1} parent=11 // pred_region
          _
        $region20: #{tpu_custom_call.1} parent=11 // pred_fallthru
          _
        // Predicated region
        $region21: #{tpu_custom_call.1} parent=11 // pred_check
          %p313 = pneg %p135
        $region22: #{tpu_custom_call.1} parent=11 // pred_check_branch
          %315 = sbr.rel (%p313) target = $region24
        $region23: #{tpu_custom_call.1} parent=11 // pred_region
          %s317 = ssub.s32 512, 512
          %318 = vsyncadd [#allocation9], %s317
          %s319 = sshll.u32 [#allocation10], 4
          %s320 = int_to_ptr.vmem [resolvable:$true] %s319
          %325 = dma.hbm_to_vmem [thread:$0]  %s3, 512, %s320, [#allocation9], 128, 128, 8
        $region24: #{tpu_custom_call.1} parent=11 // pred_fallthru
          _
        // Predicated region
        $region25: #{tpu_custom_call.1} parent=11 // pred_check
          %p326 = pneg %p156
        $region26: #{tpu_custom_call.1} parent=11 // pred_check_branch
          %328 = sbr.rel (%p326) target = $region28
        $region27: #{tpu_custom_call.1} parent=11 // pred_region
          _
        $region28: #{tpu_custom_call.1} parent=11 // pred_fallthru
          _
        // Predicated region
        $region29: #{tpu_custom_call.1} parent=11 // pred_check
          %p329 = pneg %p177
        $region30: #{tpu_custom_call.1} parent=11 // pred_check_branch
          %331 = sbr.rel (%p329) target = $region32
        $region31: #{tpu_custom_call.1} parent=11 // pred_region
          %s333 = ssub.s32 512, 512
          %334 = vsyncadd [#allocation12], %s333
          %s335 = sshll.u32 [#allocation11], 4
          %s336 = int_to_ptr.vmem [resolvable:$true] %s335
          %341 = dma.hbm_to_vmem [thread:$0]  %s5, 512, %s336, [#allocation12], 128, 128, 8
        $region32: #{tpu_custom_call.1} parent=11 // pred_fallthru
          _
        // Predicated region
        $region33: #{tpu_custom_call.1} parent=11 // pred_check
          %p342 = pneg %p198
        $region34: #{tpu_custom_call.1} parent=11 // pred_check_branch
          %344 = sbr.rel (%p342) target = $region36
        $region35: #{tpu_custom_call.1} parent=11 // pred_region
          _
        $region36: #{tpu_custom_call.1} parent=11 // pred_fallthru
          _
        // Predicated region
        $region37: #{tpu_custom_call.1} parent=11 // pred_check
          %p345 = pneg %p224
        $region38: #{tpu_custom_call.1} parent=11 // pred_check_branch
          %347 = sbr.rel (%p345) target = $region40
        $region39: #{tpu_custom_call.1} parent=11 // pred_region
          %s348 = smul.u32 2, %s38
          %p349 = scmp.lt.s32.totalorder %s348, 1
          %s350 = scalar_select %p349, %s348, 1
          %s351 = smul.addr %s350, 8
          %s352 = scalar_lea.vmem %s7, %s351
          %s353 = smul.u32 2, %s38
        $region40: #{tpu_custom_call.1} parent=11 // pred_fallthru
          _
      $region12: #{tpu_custom_call.1} parent=5 // pred_fallthru
        _
      %p354 = scmp.lt.s32.totalorder %s27, 8
      // Predicated region
      $region41: #{tpu_custom_call.1} parent=5 // pred_check
        %p355 = pneg %p354
      $region42: #{tpu_custom_call.1} parent=5 // pred_check_branch
        %357 = sbr.rel (%p355) target = $region44
      $region43: #{tpu_custom_call.1} parent=5 // pred_region
        // Predicated region
        $region45: #{tpu_custom_call.1} parent=43 // pred_check
          %p358 = pneg %p66
        $region46: #{tpu_custom_call.1} parent=43 // pred_check_branch
          %360 = sbr.rel (%p358) target = $region48
        $region47: #{tpu_custom_call.1} parent=43 // pred_region
          %s361 = sand.u32 %s56, 1
          %s362 = scalar_lea.sflag [#allocation6], %s361
          %s363 = sand.u32 %s56, 1
          %s364 = smul.addr %s363, 16
          %s365 = scalar_lea.vmem [#allocation5], %s364
          %s367 = ssub.s32 256, 256
          %368 = vsyncadd %s362, %s367
          %s369 = smul.addr %s34, 2
          %s370 = smul.addr %s369, 128
          %s371 = scalar_lea.hbm %s0, %s370
          %s372 = sshll.u32 %s365, 4
          %s373 = int_to_ptr.vmem [resolvable:$true] %s372
          %378 = dma.hbm_to_vmem [thread:$0]  %s371, 256, %s373, %s362, 128, 128, 8
        $region48: #{tpu_custom_call.1} parent=43 // pred_fallthru
          _
      $region44: #{tpu_custom_call.1} parent=5 // pred_fallthru
        _
      %p379 = scmp.le.s32.totalorder 1, %s27
      %p380 = scmp.lt.s32.totalorder %s27, 9
      %p381 = pnand %p379, %p380
      %p382 = pneg %p381
      // Predicated region
      $region49: #{tpu_custom_call.1} parent=5 // pred_check
        _
      $region50: #{tpu_custom_call.1} parent=5 // pred_check_branch
        %384 = sbr.rel (%p381) target = $region52
      $region51: #{tpu_custom_call.1} parent=5 // pred_region
        %s385 = ssub.s32 %s27, 1
        %s386 = sand.u32 %s59, 1
        %s387 = scalar_lea.sflag [#allocation6], %s386
        %s388 = sand.u32 %s59, 1
        %s389 = smul.addr %s388, 16
        %s390 = scalar_lea.vmem [#allocation5], %s389
        // Predicated region
        $region53: #{tpu_custom_call.1} parent=51 // pred_check
          %p391 = pneg %p72
        $region54: #{tpu_custom_call.1} parent=51 // pred_check_branch
          %393 = sbr.rel (%p391) target = $region56
        $region55: #{tpu_custom_call.1} parent=51 // pred_region
          %394 = dma.done %s387, 256
        $region56: #{tpu_custom_call.1} parent=51 // pred_fallthru
          _
        // Predicated region
        $region57: #{tpu_custom_call.1} parent=51 // pred_check
          %p395 = pneg %p93
        $region58: #{tpu_custom_call.1} parent=51 // pred_check_branch
          %397 = sbr.rel (%p395) target = $region60
        $region59: #{tpu_custom_call.1} parent=51 // pred_region
          %398 = dma.done [#allocation9], 512
        $region60: #{tpu_custom_call.1} parent=51 // pred_fallthru
          _
        // Predicated region
        $region61: #{tpu_custom_call.1} parent=51 // pred_check
          %p399 = pneg %p135
        $region62: #{tpu_custom_call.1} parent=51 // pred_check_branch
          %401 = sbr.rel (%p399) target = $region64
        $region63: #{tpu_custom_call.1} parent=51 // pred_region
          %402 = dma.done [#allocation9], 512
        $region64: #{tpu_custom_call.1} parent=51 // pred_fallthru
          _
        // Predicated region
        $region65: #{tpu_custom_call.1} parent=51 // pred_check
          %p403 = pneg %p177
        $region66: #{tpu_custom_call.1} parent=51 // pred_check_branch
          %405 = sbr.rel (%p403) target = $region68
        $region67: #{tpu_custom_call.1} parent=51 // pred_region
          %406 = dma.done [#allocation12], 512
        $region68: #{tpu_custom_call.1} parent=51 // pred_fallthru
          _
        %s407 = sand.u32 %s59, 1
        %s408 = scalar_lea.sflag [#allocation6], %s407
        %s409 = sand.u32 %s59, 1
        %s410 = smul.addr %s409, 16
        %s411 = scalar_lea.vmem [#allocation5], %s410
        %p412 = pneg %p72
        %p413 = pneg %p69
        %p414 = pneg %p93
        %p415 = pneg %p90
        %p416 = pneg %p114
        %p417 = pneg %p111
        %p418 = pneg %p135
        %p419 = pneg %p132
        %p420 = pneg %p156
        %p421 = pneg %p153
        %p422 = pneg %p177
        %p423 = pneg %p174
        %p424 = pneg %p198
        %p425 = pneg %p195
        %s426 = smul.u32 2, %s38
        %p427 = scmp.lt.s32.totalorder %s426, 1
        %s428 = scalar_select %p427, %s426, 1
        %s429 = smul.addr %s428, 8
        %s430 = scalar_lea.vmem %s7, %s429
        %p431 = pneg %p224
        %p432 = pneg %p221
        %p433 = pneg %p252
        %p434 = pneg %p249
        %s435 = sand.u32 %s239, 1
        %s436 = scalar_lea.sflag [#allocation7], %s435
        %s437 = sand.u32 %s239, 1
        %s438 = smul.addr %s437, 16
        %s439 = scalar_lea.vmem [#allocation13], %s438
        %p440 = pneg %p282
        %p441 = pneg %p279
        %s442 = sand.u32 %s269, 1
        %s443 = scalar_lea.sflag [#allocation15], %s442
        %s444 = sand.u32 %s269, 1
        %s445 = smul.addr %s444, 16
        %s446 = scalar_lea.vmem [#allocation14], %s445
        %s447 = smul.u32 2, %s38
        %p448 = scmp.lt.s32.totalorder %s447, 1
        %s449 = scalar_select %p448, %s447, 1
        %s450 = smul.addr %s449, 8
        %s451 = scalar_lea.vmem %s7, %s450
        %s452 = smul.u32 2, %s38
        %s453 = smul.u32 2, %s38
        %s454 = smul.u32 2, %s38
        %p455 = scmp.eq.s32.totalorder %s38, 0
        %p456 = scmp.eq.s32.totalorder %s39, 0
        %p457 = pnand %p455, %p456
        %p458 = pneg %p457
        // Predicated region
        $region69: #{tpu_custom_call.1} parent=51 // pred_check
          _
        $region70: #{tpu_custom_call.1} parent=51 // pred_check_branch
          %460 = sbr.rel (%p457) target = $region72
        $region71: #{tpu_custom_call.1} parent=51 // pred_region
          %v461 = vld [vmem:[%s390] sm:$0xff]
          %v462 = vld [vmem:[%s390 + $0x8] sm:$0xff]
          %v463 = vld [vmem:[#allocation10] sm:$0xff]
          %v464 = vld [vmem:[#allocation10 + $0x8] sm:$0xff]
          %v465 = vld [vmem:[#allocation10 + $0x10] sm:$0xff]
          %v466 = vld [vmem:[#allocation10 + $0x18] sm:$0xff]
          %v467 = vld [vmem:[%s4] sm:$0x1]
          %v469 = vlaneseq
          %v470 = vshrl.u32 %v469, 7
          %v471 = vsub.s32 0, %v470
          %v472 = vrot.slane %v467, %v471
          %vm474 = vcmask 261120
          %v476 = vsel %vm474, %v461, 0
          %v479 = vsel %vm474, %v462, 0
          %481 = vmatprep.subr.mxu0 0.0
          %482 = vmatpush1.msra.mxu0 %v463
          %483 = vmatprep.subr.mxu0 0.0
          %484 = vmatpush1.msra.mxu0 %v464
          %485 = vmatprep.subr.mxu0 0.0
          %486 = vmatpush1.msra.mxu0 %v465
          %487 = vmatprep.subr.mxu0 0.0
          %488 = vmatpush1.msra.mxu0 %v466
          %489 = vmatprep.subr.mxu0 0.0
          %490 = vmatpush1.msra.mxu0 0.0
          %491 = vmatprep.subr.mxu0 0.0
          %492 = vmatpush1.msra.mxu0 0.0
          %493 = vmatprep.subr.mxu0 0.0
          %494 = vmatpush1.msra.mxu0 0.0
          %495 = vmatprep.subr.mxu0 0.0
          %496 = vmatpush1.msra.mxu0 0.0
          %497 = vmatprep.subr.mxu0 0.0
          %498 = vmatpush1.msra.mxu0 0.0
          %499 = vmatprep.subr.mxu0 0.0
          %500 = vmatpush1.msra.mxu0 0.0
          %501 = vmatprep.subr.mxu0 0.0
          %502 = vmatpush1.msra.mxu0 0.0
          %503 = vmatprep.subr.mxu0 0.0
          %504 = vmatpush1.msra.mxu0 0.0
          %505 = vmatprep.subr.mxu0 0.0
          %506 = vmatpush1.msra.mxu0 0.0
          %507 = vmatprep.subr.mxu0 0.0
          %508 = vmatpush1.msra.mxu0 0.0
          %509 = vmatprep.subr.mxu0 0.0
          %510 = vmatpush1.msra.mxu0 0.0
          %511 = vmatprep.subr.mxu0 0.0
          %512 = vmatpush1.msra.mxu0 0.0
          %513 = vmatprep.subr.mxu0 0.0
          %514 = vmatpush1.msra.mxu0 0.0
          %515 = vmatprep.subr.mxu0 0.0
          %516 = vmatpush1.msra.mxu0 0.0
          %517 = vmatprep.subr.mxu0 0.0
          %518 = vmatpush1.msra.mxu0 0.0
          %519 = vmatprep.subr.mxu0 0.0
          %520 = vmatpush1.msra.mxu0 0.0
          %521 = vmatprep.subr.mxu0 0.0
          %522 = vmatpush1.msra.mxu0 0.0
          %523 = vmatprep.subr.mxu0 0.0
          %524 = vmatpush1.msra.mxu0 0.0
          %525 = vmatprep.subr.mxu0 0.0
          %526 = vmatpush1.msra.mxu0 0.0
          %527 = vmatprep.subr.mxu0 0.0
          %528 = vmatpush1.msra.mxu0 0.0
          %529 = vmatprep.subr.mxu0 0.0
          %530 = vmatpush1.msra.mxu0 0.0
          %531 = vmatprep.subr.mxu0 0.0
          %532 = vmatpush1.msra.mxu0 0.0
          %533 = vmatprep.subr.mxu0 0.0
          %534 = vmatpush1.msra.mxu0 0.0
          %535 = vmatprep.subr.mxu0 0.0
          %536 = vmatpush1.msra.mxu0 0.0
          %537 = vmatprep.subr.mxu0 0.0
          %538 = vmatpush1.msra.mxu0 0.0
          %539 = vmatprep.subr.mxu0 0.0
          %540 = vmatpush1.msra.mxu0 0.0
          %541 = vmatprep.subr.mxu0 0.0
          %542 = vmatpush1.msra.mxu0 0.0
          %543 = vmatprep.subr.mxu0 0.0
          %544 = vmatpush1.msra.mxu0 0.0
          %545 = vmatprep.mubr.f32.mxu0 0.0
          %546 = vmatmul.mubr.f32.gmra.mrb[0].mxu0 %v476
          %v547 = vpop.f32.mrb[0].mxu0
          %v548 = vadd.f32 %v472, %v547
          %v549 = vpop.f32.mrb[0].mxu0
          %550 = vmatprep.mubr.f32.mxu0 0.0
          %551 = vmatmul.mubr.f32.gmra.mrb[0].mxu0 %v479
          %v552 = vpop.f32.mrb[0].mxu0
          %v553 = vadd.f32 %v472, %v552
          %v554 = vpop.f32.mrb[0].mxu0
          %555 = vdwg.mxu0
          %vm556 = vcmask 64512
          %557 = vst.msk [vmem:[#allocation3] sm:$0xff] %vm556, %v548
          %558 = vst.msk [vmem:[#allocation3 + $0x8] sm:$0xff] %vm556, %v553
          %561 = vrot.lane.b32.xlu0 %v548, 96
          %v562 = vpop.permute.xlu0 %561
          %563 = vrot.lane.b32.xlu0 %v553, 96
          %v564 = vpop.permute.xlu0 %563
          %s567 = scalar_lea.vmem [#allocation3], 64
          %568 = vst.msk [vmem:[%s567] sm:$0xff] %vm556, %v562
          %569 = vst.msk [vmem:[%s567 + $0x8] sm:$0xff] %vm556, %v564
          %570 = vrot.lane.b32.xlu0 %v548, 120
          %v571 = vpop.permute.xlu0 %570
          %572 = vrot.lane.b32.xlu0 %v553, 120
          %v573 = vpop.permute.xlu0 %572
          %s576 = scalar_lea.vmem [#allocation3], 16
          %577 = vst.msk [vmem:[%s576] sm:$0xff] %vm556, %v571
          %578 = vst.msk [vmem:[%s576 + $0x8] sm:$0xff] %vm556, %v573
          %579 = vrot.lane.b32.xlu0 %v548, 88
          %v580 = vpop.permute.xlu0 %579
          %581 = vrot.lane.b32.xlu0 %v553, 88
          %v582 = vpop.permute.xlu0 %581
          %s585 = scalar_lea.vmem [#allocation3], 80
          %586 = vst.msk [vmem:[%s585] sm:$0xff] %vm556, %v580
          %587 = vst.msk [vmem:[%s585 + $0x8] sm:$0xff] %vm556, %v582
          %588 = vrot.lane.b32.xlu0 %v548, 112
          %v589 = vpop.permute.xlu0 %588
          %590 = vrot.lane.b32.xlu0 %v553, 112
          %v591 = vpop.permute.xlu0 %590
          %s594 = scalar_lea.vmem [#allocation3], 32
          %595 = vst.msk [vmem:[%s594] sm:$0xff] %vm556, %v589
          %596 = vst.msk [vmem:[%s594 + $0x8] sm:$0xff] %vm556, %v591
          %597 = vrot.lane.b32.xlu0 %v548, 80
          %v598 = vpop.permute.xlu0 %597
          %599 = vrot.lane.b32.xlu0 %v553, 80
          %v600 = vpop.permute.xlu0 %599
          %s603 = scalar_lea.vmem [#allocation3], 96
          %604 = vst.msk [vmem:[%s603] sm:$0xff] %vm556, %v598
          %605 = vst.msk [vmem:[%s603 + $0x8] sm:$0xff] %vm556, %v600
          %606 = vrot.lane.b32.xlu0 %v548, 104
          %v607 = vpop.permute.xlu0 %606
          %608 = vrot.lane.b32.xlu0 %v553, 104
          %v609 = vpop.permute.xlu0 %608
          %s612 = scalar_lea.vmem [#allocation3], 48
          %613 = vst.msk [vmem:[%s612] sm:$0xff] %vm556, %v607
          %614 = vst.msk [vmem:[%s612 + $0x8] sm:$0xff] %vm556, %v609
          %615 = vrot.lane.b32.xlu0 %v548, 72
          %v616 = vpop.permute.xlu0 %615
          %617 = vrot.lane.b32.xlu0 %v553, 72
          %v618 = vpop.permute.xlu0 %617
          %s621 = scalar_lea.vmem [#allocation3], 112
          %622 = vst.msk [vmem:[%s621] sm:$0xff] %vm556, %v616
          %623 = vst.msk [vmem:[%s621 + $0x8] sm:$0xff] %vm556, %v618
        $region72: #{tpu_custom_call.1} parent=51 // pred_fallthru
          _
        // Predicated region
        $region73: #{tpu_custom_call.1} parent=51 // pred_check
          %p624 = pneg %p456
        $region74: #{tpu_custom_call.1} parent=51 // pred_check_branch
          %626 = sbr.rel (%p624) target = $region76
        $region75: #{tpu_custom_call.1} parent=51 // pred_region
          %s627 = smul.u32 %s38, 16
          %s628 = scalar_lea.vmem %s390, %s627 [#allocation5]
          %v629 = vld [vmem:[%s628] sm:$0xff]
          %v630 = vld [vmem:[%s628 + $0x8] sm:$0xff]
          %v631 = vld [vmem:[#allocation8] sm:$0xff]
          %v632 = vld [vmem:[#allocation8 + $0x8] sm:$0xff]
          %v633 = vld [vmem:[#allocation8 + $0x10] sm:$0xff]
          %v634 = vld [vmem:[#allocation8 + $0x18] sm:$0xff]
          %v635 = vld [vmem:[%s2] sm:$0x1]
          %v637 = vlaneseq
          %v638 = vshrl.u32 %v637, 7
          %v639 = vsub.s32 0, %v638
          %v640 = vrot.slane %v635, %v639
          %vm642 = vcmask 261120
          %v644 = vsel %vm642, %v629, 0
          %v647 = vsel %vm642, %v630, 0
          %649 = vmatprep.subr.mxu0 0.0
          %650 = vmatpush1.msra.mxu0 %v631
          %651 = vmatprep.subr.mxu0 0.0
          %652 = vmatpush1.msra.mxu0 %v632
          %653 = vmatprep.subr.mxu0 0.0
          %654 = vmatpush1.msra.mxu0 %v633
          %655 = vmatprep.subr.mxu0 0.0
          %656 = vmatpush1.msra.mxu0 %v634
          %657 = vmatprep.subr.mxu0 0.0
          %658 = vmatpush1.msra.mxu0 0.0
          %659 = vmatprep.subr.mxu0 0.0
          %660 = vmatpush1.msra.mxu0 0.0
          %661 = vmatprep.subr.mxu0 0.0
          %662 = vmatpush1.msra.mxu0 0.0
          %663 = vmatprep.subr.mxu0 0.0
          %664 = vmatpush1.msra.mxu0 0.0
          %665 = vmatprep.subr.mxu0 0.0
          %666 = vmatpush1.msra.mxu0 0.0
          %667 = vmatprep.subr.mxu0 0.0
          %668 = vmatpush1.msra.mxu0 0.0
          %669 = vmatprep.subr.mxu0 0.0
          %670 = vmatpush1.msra.mxu0 0.0
          %671 = vmatprep.subr.mxu0 0.0
          %672 = vmatpush1.msra.mxu0 0.0
          %673 = vmatprep.subr.mxu0 0.0
          %674 = vmatpush1.msra.mxu0 0.0
          %675 = vmatprep.subr.mxu0 0.0
          %676 = vmatpush1.msra.mxu0 0.0
          %677 = vmatprep.subr.mxu0 0.0
          %678 = vmatpush1.msra.mxu0 0.0
          %679 = vmatprep.subr.mxu0 0.0
          %680 = vmatpush1.msra.mxu0 0.0
          %681 = vmatprep.subr.mxu0 0.0
          %682 = vmatpush1.msra.mxu0 0.0
          %683 = vmatprep.subr.mxu0 0.0
          %684 = vmatpush1.msra.mxu0 0.0
          %685 = vmatprep.subr.mxu0 0.0
          %686 = vmatpush1.msra.mxu0 0.0
          %687 = vmatprep.subr.mxu0 0.0
          %688 = vmatpush1.msra.mxu0 0.0
          %689 = vmatprep.subr.mxu0 0.0
          %690 = vmatpush1.msra.mxu0 0.0
          %691 = vmatprep.subr.mxu0 0.0
          %692 = vmatpush1.msra.mxu0 0.0
          %693 = vmatprep.subr.mxu0 0.0
          %694 = vmatpush1.msra.mxu0 0.0
          %695 = vmatprep.subr.mxu0 0.0
          %696 = vmatpush1.msra.mxu0 0.0
          %697 = vmatprep.subr.mxu0 0.0
          %698 = vmatpush1.msra.mxu0 0.0
          %699 = vmatprep.subr.mxu0 0.0
          %700 = vmatpush1.msra.mxu0 0.0
          %701 = vmatprep.subr.mxu0 0.0
          %702 = vmatpush1.msra.mxu0 0.0
          %703 = vmatprep.subr.mxu0 0.0
          %704 = vmatpush1.msra.mxu0 0.0
          %705 = vmatprep.subr.mxu0 0.0
          %706 = vmatpush1.msra.mxu0 0.0
          %707 = vmatprep.subr.mxu0 0.0
          %708 = vmatpush1.msra.mxu0 0.0
          %709 = vmatprep.subr.mxu0 0.0
          %710 = vmatpush1.msra.mxu0 0.0
          %711 = vmatprep.subr.mxu0 0.0
          %712 = vmatpush1.msra.mxu0 0.0
          %713 = vmatprep.mubr.f32.mxu0 0.0
          %714 = vmatmul.mubr.f32.gmra.mrb[0].mxu0 %v644
          %v715 = vpop.f32.mrb[0].mxu0
          %v716 = vadd.f32 %v640, %v715
          %v717 = vpop.f32.mrb[0].mxu0
          %718 = vmatprep.mubr.f32.mxu0 0.0
          %719 = vmatmul.mubr.f32.gmra.mrb[0].mxu0 %v647
          %v720 = vpop.f32.mrb[0].mxu0
          %v721 = vadd.f32 %v640, %v720
          %v722 = vpop.f32.mrb[0].mxu0
          %723 = vdwg.mxu0
          %vm724 = vcmask 64512
          %725 = vst.msk [vmem:[#allocation2] sm:$0xff] %vm724, %v716
          %726 = vst.msk [vmem:[#allocation2 + $0x8] sm:$0xff] %vm724, %v721
          %729 = vrot.lane.b32.xlu0 %v716, 120
          %v730 = vpop.permute.xlu0 %729
          %731 = vrot.lane.b32.xlu0 %v721, 120
          %v732 = vpop.permute.xlu0 %731
          %s735 = scalar_lea.vmem [#allocation2], 16
          %736 = vst.msk [vmem:[%s735] sm:$0xff] %vm724, %v730
          %737 = vst.msk [vmem:[%s735 + $0x8] sm:$0xff] %vm724, %v732
          %738 = vrot.lane.b32.xlu0 %v716, 112
          %v739 = vpop.permute.xlu0 %738
          %740 = vrot.lane.b32.xlu0 %v721, 112
          %v741 = vpop.permute.xlu0 %740
          %s744 = scalar_lea.vmem [#allocation2], 32
          %745 = vst.msk [vmem:[%s744] sm:$0xff] %vm724, %v739
          %746 = vst.msk [vmem:[%s744 + $0x8] sm:$0xff] %vm724, %v741
          %747 = vrot.lane.b32.xlu0 %v716, 104
          %v748 = vpop.permute.xlu0 %747
          %749 = vrot.lane.b32.xlu0 %v721, 104
          %v750 = vpop.permute.xlu0 %749
          %s753 = scalar_lea.vmem [#allocation2], 48
          %754 = vst.msk [vmem:[%s753] sm:$0xff] %vm724, %v748
          %755 = vst.msk [vmem:[%s753 + $0x8] sm:$0xff] %vm724, %v750
        $region76: #{tpu_custom_call.1} parent=51 // pred_fallthru
          _
        %s756 = smul.u32 %s39, 16
        %s757 = scalar_lea.vmem [#allocation2], %s756
        %v758 = vld [vmem:[%s757] sm:$0xff]
        %v759 = vld [vmem:[%s757 + $0x8] sm:$0xff]
        %s760 = scalar_lea.vmem [#allocation3], %s756
        %v761 = vld [vmem:[%s760] sm:$0xff]
        %v762 = vld [vmem:[%s760 + $0x8] sm:$0xff]
        %s763 = sadd.s32 %s39, 4
        %s764 = smul.u32 %s763, 16
        %s765 = scalar_lea.vmem [#allocation3], %s764
        %v766 = vld [vmem:[%s765] sm:$0xff]
        %v767 = vld [vmem:[%s765 + $0x8] sm:$0xff]
        %v768 = vld [vmem:[%s451] sm:$0xff]
        %v769 = vld [vmem:[%s451 + $0x8] sm:$0xff]
        %vm770 = vcmask 64512
        %v772 = vsel %vm770, %v758, 0
        %v775 = vsel %vm770, %v759, 0
        %v778 = vsel %vm770, %v761, 0
        %v781 = vsel %vm770, %v762, 0
        %783 = vmatprep.subr.mxu0 0.0
        %784 = vmatpush1.xpose.msra.mxu0 %v778
        %785 = vmatprep.subr.mxu0 0.0
        %786 = vmatpush1.xpose.msra.mxu0 %v781
        %787 = vmatprep.subr.mxu0 0.0
        %788 = vmatpush1.xpose.msra.mxu0 0.0
        %789 = vmatprep.subr.mxu0 0.0
        %790 = vmatpush1.xpose.msra.mxu0 0.0
        %791 = vmatprep.subr.mxu0 0.0
        %792 = vmatpush1.xpose.msra.mxu0 0.0
        %793 = vmatprep.subr.mxu0 0.0
        %794 = vmatpush1.xpose.msra.mxu0 0.0
        %795 = vmatprep.subr.mxu0 0.0
        %796 = vmatpush1.xpose.msra.mxu0 0.0
        %797 = vmatprep.subr.mxu0 0.0
        %798 = vmatpush1.xpose.msra.mxu0 0.0
        %799 = vmatprep.subr.mxu0 0.0
        %800 = vmatpush1.xpose.msra.mxu0 0.0
        %801 = vmatprep.subr.mxu0 0.0
        %802 = vmatpush1.xpose.msra.mxu0 0.0
        %803 = vmatprep.subr.mxu0 0.0
        %804 = vmatpush1.xpose.msra.mxu0 0.0
        %805 = vmatprep.subr.mxu0 0.0
        %806 = vmatpush1.xpose.msra.mxu0 0.0
        %807 = vmatprep.subr.mxu0 0.0
        %808 = vmatpush1.xpose.msra.mxu0 0.0
        %809 = vmatprep.subr.mxu0 0.0
        %810 = vmatpush1.xpose.msra.mxu0 0.0
        %811 = vmatprep.subr.mxu0 0.0
        %812 = vmatpush1.xpose.msra.mxu0 0.0
        %813 = vmatprep.subr.mxu0 0.0
        %814 = vmatpush1.xpose.msra.mxu0 0.0
        %815 = vmatprep.subr.mxu0 0.0
        %816 = vmatpush1.xpose.msra.mxu0 0.0
        %817 = vmatprep.subr.mxu0 0.0
        %818 = vmatpush1.xpose.msra.mxu0 0.0
        %819 = vmatprep.subr.mxu0 0.0
        %820 = vmatpush1.xpose.msra.mxu0 0.0
        %821 = vmatprep.subr.mxu0 0.0
        %822 = vmatpush1.xpose.msra.mxu0 0.0
        %823 = vmatprep.subr.mxu0 0.0
        %824 = vmatpush1.xpose.msra.mxu0 0.0
        %825 = vmatprep.subr.mxu0 0.0
        %826 = vmatpush1.xpose.msra.mxu0 0.0
        %827 = vmatprep.subr.mxu0 0.0
        %828 = vmatpush1.xpose.msra.mxu0 0.0
        %829 = vmatprep.subr.mxu0 0.0
        %830 = vmatpush1.xpose.msra.mxu0 0.0
        %831 = vmatprep.subr.mxu0 0.0
        %832 = vmatpush1.xpose.msra.mxu0 0.0
        %833 = vmatprep.subr.mxu0 0.0
        %834 = vmatpush1.xpose.msra.mxu0 0.0
        %835 = vmatprep.subr.mxu0 0.0
        %836 = vmatpush1.xpose.msra.mxu0 0.0
        %837 = vmatprep.subr.mxu0 0.0
        %838 = vmatpush1.xpose.msra.mxu0 0.0
        %839 = vmatprep.subr.mxu0 0.0
        %840 = vmatpush1.xpose.msra.mxu0 0.0
        %841 = vmatprep.subr.mxu0 0.0
        %842 = vmatpush1.xpose.msra.mxu0 0.0
        %843 = vmatprep.subr.mxu0 0.0
        %844 = vmatpush1.xpose.msra.mxu0 0.0
        %845 = vmatprep.subr.mxu0 0.0
        %846 = vmatpush1.xpose.msra.mxu0 0.0
        %847 = vmatprep.mubr.f32.mxu0 0.0
        %848 = vmatmul.mubr.f32.gmra.mrb[0].mxu0 %v772
        %v849 = vpop.f32.mrb[0].mxu0
        %v850 = vadd.f32 %v768, %v849
        %v851 = vpop.f32.mrb[0].mxu0
        %852 = vmatprep.mubr.f32.mxu0 0.0
        %853 = vmatmul.mubr.f32.gmra.mrb[0].mxu0 %v775
        %v854 = vpop.f32.mrb[0].mxu0
        %v855 = vadd.f32 %v769, %v854
        %v856 = vpop.f32.mrb[0].mxu0
        %857 = vdwg.mxu0
        %vm858 = vcmask 130048
        %859 = vst.msk [vmem:[%s446] sm:$0xff] %vm858, %v850
        %860 = vst.msk [vmem:[%s446 + $0x8] sm:$0xff] %vm858, %v855
        %v861 = vsel %vm858, %v850, -inf
        %862 = vmax.xlane.f32.xlu0 %v861
        %v863 = vpop.xlane.xlu0 %862
        %v864 = vsel %vm858, %v855, -inf
        %865 = vmax.xlane.f32.xlu0 %v864
        %v866 = vpop.xlane.xlu0 %865
        %v867 = vsub.f32 %v850, %v863
        %v868 = vsub.f32 %v855, %v866
        %v869 = vmul.f32 %v867, 1.442695
        %v870 = vpow.pop %v869
        %v871 = vmul.f32 %v868, 1.442695
        %v872 = vpow.pop %v871
        %v873 = vsel %vm858, %v870, 0.0
        %874 = vadd.xlane.f32.xlu0 %v873
        %v875 = vpop.xlane.xlu0 %874
        %v876 = vsel %vm858, %v872, 0.0
        %877 = vadd.xlane.f32.xlu0 %v876
        %v878 = vpop.xlane.xlu0 %877
        %v879 = vrcp.pop %v875
        %v880 = vrcp.pop %v878
        %v881 = vmul.f32 %v870, %v879
        %v882 = vmul.f32 %v872, %v880
        %v884 = vsel %vm858, %v881, 0
        %v887 = vsel %vm858, %v882, 0
        %889 = vmatprep.subr.mxu0 0.0
        %890 = vmatpush1.msra.mxu0 %v766
        %891 = vmatprep.subr.mxu0 0.0
        %892 = vmatpush1.msra.mxu0 %v767
        %893 = vmatprep.subr.mxu0 0.0
        %894 = vmatpush1.msra.mxu0 0.0
        %895 = vmatprep.subr.mxu0 0.0
        %896 = vmatpush1.msra.mxu0 0.0
        %897 = vmatprep.subr.mxu0 0.0
        %898 = vmatpush1.msra.mxu0 0.0
        %899 = vmatprep.subr.mxu0 0.0
        %900 = vmatpush1.msra.mxu0 0.0
        %901 = vmatprep.subr.mxu0 0.0
        %902 = vmatpush1.msra.mxu0 0.0
        %903 = vmatprep.subr.mxu0 0.0
        %904 = vmatpush1.msra.mxu0 0.0
        %905 = vmatprep.subr.mxu0 0.0
        %906 = vmatpush1.msra.mxu0 0.0
        %907 = vmatprep.subr.mxu0 0.0
        %908 = vmatpush1.msra.mxu0 0.0
        %909 = vmatprep.subr.mxu0 0.0
        %910 = vmatpush1.msra.mxu0 0.0
        %911 = vmatprep.subr.mxu0 0.0
        %912 = vmatpush1.msra.mxu0 0.0
        %913 = vmatprep.subr.mxu0 0.0
        %914 = vmatpush1.msra.mxu0 0.0
        %915 = vmatprep.subr.mxu0 0.0
        %916 = vmatpush1.msra.mxu0 0.0
        %917 = vmatprep.subr.mxu0 0.0
        %918 = vmatpush1.msra.mxu0 0.0
        %919 = vmatprep.subr.mxu0 0.0
        %920 = vmatpush1.msra.mxu0 0.0
        %921 = vmatprep.subr.mxu0 0.0
        %922 = vmatpush1.msra.mxu0 0.0
        %923 = vmatprep.subr.mxu0 0.0
        %924 = vmatpush1.msra.mxu0 0.0
        %925 = vmatprep.subr.mxu0 0.0
        %926 = vmatpush1.msra.mxu0 0.0
        %927 = vmatprep.subr.mxu0 0.0
        %928 = vmatpush1.msra.mxu0 0.0
        %929 = vmatprep.subr.mxu0 0.0
        %930 = vmatpush1.msra.mxu0 0.0
        %931 = vmatprep.subr.mxu0 0.0
        %932 = vmatpush1.msra.mxu0 0.0
        %933 = vmatprep.subr.mxu0 0.0
        %934 = vmatpush1.msra.mxu0 0.0
        %935 = vmatprep.subr.mxu0 0.0
        %936 = vmatpush1.msra.mxu0 0.0
        %937 = vmatprep.subr.mxu0 0.0
        %938 = vmatpush1.msra.mxu0 0.0
        %939 = vmatprep.subr.mxu0 0.0
        %940 = vmatpush1.msra.mxu0 0.0
        %941 = vmatprep.subr.mxu0 0.0
        %942 = vmatpush1.msra.mxu0 0.0
        %943 = vmatprep.subr.mxu0 0.0
        %944 = vmatpush1.msra.mxu0 0.0
        %945 = vmatprep.subr.mxu0 0.0
        %946 = vmatpush1.msra.mxu0 0.0
        %947 = vmatprep.subr.mxu0 0.0
        %948 = vmatpush1.msra.mxu0 0.0
        %949 = vmatprep.subr.mxu0 0.0
        %950 = vmatpush1.msra.mxu0 0.0
        %951 = vmatprep.subr.mxu0 0.0
        %952 = vmatpush1.msra.mxu0 0.0
        %953 = vmatprep.mubr.f32.mxu0 0.0
        %954 = vmatmul.mubr.f32.gmra.mrb[0].mxu0 %v884
        %v955 = vpop.f32.mrb[0].mxu0
        %v956 = vadd.f32 0.0, %v955
        %v957 = vpop.f32.mrb[0].mxu0
        %958 = vmatprep.mubr.f32.mxu0 0.0
        %959 = vmatmul.mubr.f32.gmra.mrb[0].mxu0 %v887
        %v960 = vpop.f32.mrb[0].mxu0
        %v961 = vadd.f32 0.0, %v960
        %v962 = vpop.f32.mrb[0].mxu0
        %963 = vdwg.mxu0
        %s964 = scalar_lea.vmem [#allocation4], %s756
        %965 = vst.msk [vmem:[%s964] sm:$0xff] %vm770, %v956
        %966 = vst.msk [vmem:[%s964 + $0x8] sm:$0xff] %vm770, %v961
        %p967 = scmp.eq.s32.totalorder %s39, 3
        // Predicated region
        $region77: #{tpu_custom_call.1} parent=51 // pred_check
          %p968 = pneg %p967
        $region78: #{tpu_custom_call.1} parent=51 // pred_check_branch
          %970 = sbr.rel (%p968) target = $region80
        $region79: #{tpu_custom_call.1} parent=51 // pred_region
          %v971 = vld [vmem:[#allocation4] sm:$0xff]
          %v972 = vld [vmem:[#allocation4 + $0x8] sm:$0xff]
          %s973 = scalar_lea.vmem [#allocation4], 16
          %v974 = vld [vmem:[%s973] sm:$0xff]
          %v975 = vld [vmem:[%s973 + $0x8] sm:$0xff]
          %s976 = scalar_lea.vmem [#allocation4], 32
          %v977 = vld [vmem:[%s976] sm:$0xff]
          %v978 = vld [vmem:[%s976 + $0x8] sm:$0xff]
          %s979 = scalar_lea.vmem [#allocation4], 48
          %v980 = vld [vmem:[%s979] sm:$0xff]
          %v981 = vld [vmem:[%s979 + $0x8] sm:$0xff]
          %984 = vrot.lane.b32.xlu0 %v974, 8
          %v985 = vpop.permute.xlu0 %984
          %986 = vrot.lane.b32.xlu0 %v975, 8
          %v987 = vpop.permute.xlu0 %986
          %992 = vrot.lane.b32.xlu0 %v977, 16
          %v993 = vpop.permute.xlu0 %992
          %994 = vrot.lane.b32.xlu0 %v978, 16
          %v995 = vpop.permute.xlu0 %994
          %1000 = vrot.lane.b32.xlu0 %v980, 24
          %v1001 = vpop.permute.xlu0 %1000
          %1002 = vrot.lane.b32.xlu0 %v981, 24
          %v1003 = vpop.permute.xlu0 %1002
          %v1006 = vsel %vm770, %v971, %v985
          %v1007 = vsel %vm770, %v972, %v987
          %v1008 = vsel %vm858, %v1006, %v993
          %v1009 = vsel %vm858, %v1007, %v995
          %vm1010 = vcmask 195584
          %v1011 = vsel %vm1010, %v1008, %v1001
          %v1012 = vsel %vm1010, %v1009, %v1003
          %v1013 = vld [vmem:[#allocation11] sm:$0xff]
          %v1014 = vld [vmem:[#allocation11 + $0x8] sm:$0xff]
          %v1015 = vld [vmem:[#allocation11 + $0x10] sm:$0xff]
          %v1016 = vld [vmem:[#allocation11 + $0x18] sm:$0xff]
          %v1017 = vld [vmem:[%s6] sm:$0x1]
          %v1019 = vlaneseq
          %v1020 = vshrl.u32 %v1019, 7
          %v1021 = vsub.s32 0, %v1020
          %v1022 = vrot.slane %v1017, %v1021
          %vm1024 = vcmask 261120
          %v1026 = vsel %vm1024, %v1011, 0
          %v1029 = vsel %vm1024, %v1012, 0
          %1031 = vmatprep.subr.mxu0 0.0
          %1032 = vmatpush1.msra.mxu0 %v1013
          %1033 = vmatprep.subr.mxu0 0.0
          %1034 = vmatpush1.msra.mxu0 %v1014
          %1035 = vmatprep.subr.mxu0 0.0
          %1036 = vmatpush1.msra.mxu0 %v1015
          %1037 = vmatprep.subr.mxu0 0.0
          %1038 = vmatpush1.msra.mxu0 %v1016
          %1039 = vmatprep.subr.mxu0 0.0
          %1040 = vmatpush1.msra.mxu0 0.0
          %1041 = vmatprep.subr.mxu0 0.0
          %1042 = vmatpush1.msra.mxu0 0.0
          %1043 = vmatprep.subr.mxu0 0.0
          %1044 = vmatpush1.msra.mxu0 0.0
          %1045 = vmatprep.subr.mxu0 0.0
          %1046 = vmatpush1.msra.mxu0 0.0
          %1047 = vmatprep.subr.mxu0 0.0
          %1048 = vmatpush1.msra.mxu0 0.0
          %1049 = vmatprep.subr.mxu0 0.0
          %1050 = vmatpush1.msra.mxu0 0.0
          %1051 = vmatprep.subr.mxu0 0.0
          %1052 = vmatpush1.msra.mxu0 0.0
          %1053 = vmatprep.subr.mxu0 0.0
          %1054 = vmatpush1.msra.mxu0 0.0
          %1055 = vmatprep.subr.mxu0 0.0
          %1056 = vmatpush1.msra.mxu0 0.0
          %1057 = vmatprep.subr.mxu0 0.0
          %1058 = vmatpush1.msra.mxu0 0.0
          %1059 = vmatprep.subr.mxu0 0.0
          %1060 = vmatpush1.msra.mxu0 0.0
          %1061 = vmatprep.subr.mxu0 0.0
          %1062 = vmatpush1.msra.mxu0 0.0
          %1063 = vmatprep.subr.mxu0 0.0
          %1064 = vmatpush1.msra.mxu0 0.0
          %1065 = vmatprep.subr.mxu0 0.0
          %1066 = vmatpush1.msra.mxu0 0.0
          %1067 = vmatprep.subr.mxu0 0.0
          %1068 = vmatpush1.msra.mxu0 0.0
          %1069 = vmatprep.subr.mxu0 0.0
          %1070 = vmatpush1.msra.mxu0 0.0
          %1071 = vmatprep.subr.mxu0 0.0
          %1072 = vmatpush1.msra.mxu0 0.0
          %1073 = vmatprep.subr.mxu0 0.0
          %1074 = vmatpush1.msra.mxu0 0.0
          %1075 = vmatprep.subr.mxu0 0.0
          %1076 = vmatpush1.msra.mxu0 0.0
          %1077 = vmatprep.subr.mxu0 0.0
          %1078 = vmatpush1.msra.mxu0 0.0
          %1079 = vmatprep.subr.mxu0 0.0
          %1080 = vmatpush1.msra.mxu0 0.0
          %1081 = vmatprep.subr.mxu0 0.0
          %1082 = vmatpush1.msra.mxu0 0.0
          %1083 = vmatprep.subr.mxu0 0.0
          %1084 = vmatpush1.msra.mxu0 0.0
          %1085 = vmatprep.subr.mxu0 0.0
          %1086 = vmatpush1.msra.mxu0 0.0
          %1087 = vmatprep.subr.mxu0 0.0
          %1088 = vmatpush1.msra.mxu0 0.0
          %1089 = vmatprep.subr.mxu0 0.0
          %1090 = vmatpush1.msra.mxu0 0.0
          %1091 = vmatprep.subr.mxu0 0.0
          %1092 = vmatpush1.msra.mxu0 0.0
          %1093 = vmatprep.subr.mxu0 0.0
          %1094 = vmatpush1.msra.mxu0 0.0
          %1095 = vmatprep.mubr.f32.mxu0 0.0
          %1096 = vmatmul.mubr.f32.gmra.mrb[0].mxu0 %v1026
          %v1097 = vpop.f32.mrb[0].mxu0
          %v1098 = vadd.f32 %v1022, %v1097
          %v1099 = vpop.f32.mrb[0].mxu0
          %1100 = vmatprep.mubr.f32.mxu0 0.0
          %1101 = vmatmul.mubr.f32.gmra.mrb[0].mxu0 %v1029
          %v1102 = vpop.f32.mrb[0].mxu0
          %v1103 = vadd.f32 %v1022, %v1102
          %v1104 = vpop.f32.mrb[0].mxu0
          %1105 = vdwg.mxu0
          %1106 = vst.msk [vmem:[%s439] sm:$0xff] %vm1024, %v1098
          %1107 = vst.msk [vmem:[%s439 + $0x8] sm:$0xff] %vm1024, %v1103
        $region80: #{tpu_custom_call.1} parent=51 // pred_fallthru
          _
        %s1108 = sand.u32 %s239, 1
        %s1109 = scalar_lea.sflag [#allocation7], %s1108
        %s1110 = sand.u32 %s239, 1
        %s1111 = smul.addr %s1110, 16
        %s1112 = scalar_lea.vmem [#allocation13], %s1111
        %s1113 = sand.u32 %s269, 1
        %s1114 = scalar_lea.sflag [#allocation15], %s1113
        %s1115 = sand.u32 %s269, 1
        %s1116 = smul.addr %s1115, 16
        %s1117 = scalar_lea.vmem [#allocation14], %s1116
        // Predicated region
        $region81: #{tpu_custom_call.1} parent=51 // pred_check
          %p1118 = pneg %p249
        $region82: #{tpu_custom_call.1} parent=51 // pred_check_branch
          %1120 = sbr.rel (%p1118) target = $region84
        $region83: #{tpu_custom_call.1} parent=51 // pred_region
          %s1121 = smul.u32 2, %s38
          %s1123 = ssub.s32 256, 256
          %1124 = vsyncadd %s1109, %s1123
          %s1125 = smul.addr %s37, 2
          %s1126 = sadd.s32 %s1121, %s1125
          %s1127 = smul.addr %s1126, 128
          %s1128 = scalar_lea.hbm %s8, %s1127
          %s1129 = sshll.u32 %s1112, 4
          %s1130 = int_to_ptr.vmem [resolvable:$true] %s1129
          %1135 = dma.vmem_to_hbm [thread:$0]  %s1130, 256, %s1128, %s1109, 128, 128, 8
        $region84: #{tpu_custom_call.1} parent=51 // pred_fallthru
          _
        // Predicated region
        $region85: #{tpu_custom_call.1} parent=51 // pred_check
          %p1136 = pneg %p279
        $region86: #{tpu_custom_call.1} parent=51 // pred_check_branch
          %1138 = sbr.rel (%p1136) target = $region88
        $region87: #{tpu_custom_call.1} parent=51 // pred_region
          %s1139 = smul.u32 2, %s38
          %s1141 = ssub.s32 256, 256
          %1142 = vsyncadd %s1114, %s1141
          %s1143 = smul.addr %s39, 2
          %s1144 = sadd.s32 %s1139, %s1143
          %s1145 = smul.addr %s37, 8
          %s1146 = sadd.s32 %s1144, %s1145
          %s1147 = smul.addr %s1146, 128
          %s1148 = scalar_lea.hbm %s9, %s1147
          %s1149 = sshll.u32 %s1117, 4
          %s1150 = int_to_ptr.vmem [resolvable:$true] %s1149
          %1155 = dma.vmem_to_hbm [thread:$0]  %s1150, 256, %s1148, %s1114, 128, 128, 8
        $region88: #{tpu_custom_call.1} parent=51 // pred_fallthru
          _
      $region52: #{tpu_custom_call.1} parent=5 // pred_fallthru
        _
      %p1156 = scmp.le.s32.totalorder 2, %s27
      // Predicated region
      $region89: #{tpu_custom_call.1} parent=5 // pred_check
        %p1157 = pneg %p1156
      $region90: #{tpu_custom_call.1} parent=5 // pred_check_branch
        %1159 = sbr.rel (%p1157) target = $region92
      $region91: #{tpu_custom_call.1} parent=5 // pred_region
        %s1160 = ssub.s32 %s27, 2
        // Predicated region
        $region93: #{tpu_custom_call.1} parent=91 // pred_check
          %p1161 = pneg %p255
        $region94: #{tpu_custom_call.1} parent=91 // pred_check_branch
          %1163 = sbr.rel (%p1161) target = $region96
        $region95: #{tpu_custom_call.1} parent=91 // pred_region
          %s1164 = sand.u32 %s240, 1
          %s1165 = scalar_lea.sflag [#allocation7], %s1164
          %s1166 = sand.u32 %s240, 1
          %s1167 = smul.addr %s1166, 16
          %s1168 = scalar_lea.vmem [#allocation13], %s1167
          %1169 = dma.done %s1165, 256
        $region96: #{tpu_custom_call.1} parent=91 // pred_fallthru
          _
        // Predicated region
        $region97: #{tpu_custom_call.1} parent=91 // pred_check
          %p1170 = pneg %p285
        $region98: #{tpu_custom_call.1} parent=91 // pred_check_branch
          %1172 = sbr.rel (%p1170) target = $region100
        $region99: #{tpu_custom_call.1} parent=91 // pred_region
          %s1173 = sand.u32 %s270, 1
          %s1174 = scalar_lea.sflag [#allocation15], %s1173
          %s1175 = sand.u32 %s270, 1
          %s1176 = smul.addr %s1175, 16
          %s1177 = scalar_lea.vmem [#allocation14], %s1176
          %1178 = dma.done %s1174, 256
        $region100: #{tpu_custom_call.1} parent=91 // pred_fallthru
          _
      $region92: #{tpu_custom_call.1} parent=5 // pred_fallthru
        _
    $region6: #{tpu_custom_call.1} parent=1 // loop_footer
      %s31 = sadd.s32 1, %s27
    $region7: #{tpu_custom_call.1} parent=1 // loop_footer_branch
      %26 = sbr.rel target = $region3
    $region8: #{tpu_custom_call.1} parent=1 // loop_exit
      _
    %1179 = vsyncpa [#allocation6], 1
    %s1180 = scalar_lea.sflag [#allocation6], 1
    %1181 = vsyncpa %s1180, 1
    %1182 = vsyncpa [#allocation9], 1
    %1183 = vsyncpa [#allocation12], 1
    %1184 = vsyncpa [#allocation7], 1
    %s1185 = scalar_lea.sflag [#allocation7], 1
    %1186 = vsyncpa %s1185, 1
    %1187 = vsyncpa [#allocation15], 1
    %s1188 = scalar_lea.sflag [#allocation15], 1
    %1189 = vsyncpa %s1188, 1

</llo_original>
